<compile_context>
chip_gen: v7x
topology: tpu7x:2x2x1
jax: 0.10.0
libtpu: 0.0.40
codegen_flags: <defaults>
</compile_context>

<pallas_src>
import math
import functools

import jax
import jax.numpy as jnp
from jax.experimental import pallas as pl
from jax.experimental.pallas import tpu as pltpu


_VMEM_LIMIT_BYTES = 48 * 1024 * 1024   # > 16/32 MiB scoped defaults, < 64 MiB v7x physical


def _compiler_params(dimension_semantics):
    return pltpu.CompilerParams(dimension_semantics=dimension_semantics,
                                vmem_limit_bytes=_VMEM_LIMIT_BYTES)


# ---------------------------------------------------------------------------
# Tiling helpers
# ---------------------------------------------------------------------------

def _pick_tile(dim, cap, quantum, min_steps=1):
    """Largest multiple of `quantum` dividing `dim` and <= cap, preferring a tile
    that leaves at least `min_steps` grid steps; falls back to `dim` itself."""
    cands = [t for t in range(quantum, min(dim, cap) + 1, quantum) if dim % t == 0]
    if not cands:
        return dim
    pref = [t for t in cands if dim // t >= min_steps]
    return max(pref) if pref else max(cands)


def _pick_batch_tile(n, rows_per_elem, row_cap=512):
    """Largest divisor of n with <= row_cap rows per step, preferring >=2 steps
    so both v7x TensorCores get work."""
    divs = [d for d in range(1, n + 1) if n % d == 0 and d * rows_per_elem <= row_cap]
    if not divs:
        return 1
    multi = [d for d in divs if n // d >= 2]
    return max(multi) if multi else max(divs)


# ---------------------------------------------------------------------------
# Fused multi-head attention + residual + LayerNorm kernel (Bt batch elements)
# ---------------------------------------------------------------------------

def _mha_ln_kernel(x_ref, kv_ref, wq_ref, bq_ref, wk_ref, bk_ref, wv_ref, bv_ref,
                   wo_ref, bo_ref, g_ref, beta_ref, o_ref, attn_scr,
                   *, nhead, scale, eps):
    Bt, Lq, E = x_ref.shape
    Lk = kv_ref.shape[1]
    Dh = E // nhead

    x = x_ref[...]                                          # (Bt, Lq, E) f32 residual
    xf = x.reshape(Bt * Lq, E).astype(jnp.bfloat16)
    kvf = kv_ref[...].reshape(Bt * Lk, E).astype(jnp.bfloat16)

    # Full-width projections: bf16 MXU operands, f32 accumulation.
    q = (jnp.dot(xf, wq_ref[...], preferred_element_type=jnp.float32)
         + bq_ref[...]).astype(jnp.bfloat16).reshape(Bt, Lq, E)
    k = (jnp.dot(kvf, wk_ref[...], preferred_element_type=jnp.float32)
         + bk_ref[...]).astype(jnp.bfloat16).reshape(Bt, Lk, E)
    v = (jnp.dot(kvf, wv_ref[...], preferred_element_type=jnp.float32)
         + bv_ref[...]).astype(jnp.bfloat16).reshape(Bt, Lk, E)

    # Per-head attention, batched over the Bt batch elements.  Head outputs are
    # written into a VMEM scratch so the out-projection is one full-K matmul.
    # TODO(synk): flash-style K/V tiling with online softmax for long Lk.
    for h in range(nhead):
        lo = h * Dh
        qh = q[:, :, lo:lo + Dh]
        kh = k[:, :, lo:lo + Dh]
        vh = v[:, :, lo:lo + Dh]
        s = jnp.einsum('bqd,bkd->bqk', qh, kh,
                       preferred_element_type=jnp.float32) * scale
        s = s - jnp.max(s, axis=-1, keepdims=True)
        p = jnp.exp(s)
        p = p / jnp.sum(p, axis=-1, keepdims=True)          # exact divide (parity)
        oh = jnp.einsum('bqk,bkd->bqd', p.astype(jnp.bfloat16), vh,
                        preferred_element_type=jnp.float32)  # (Bt, Lq, Dh) f32
        attn_scr[:, lo:lo + Dh] = oh.reshape(Bt * Lq, Dh)

    attn = attn_scr[...].astype(jnp.bfloat16)               # (Bt*Lq, E)
    out = (jnp.dot(attn, wo_ref[...], preferred_element_type=jnp.float32)
           + bo_ref[...]).reshape(Bt, Lq, E)

    # Residual add + LayerNorm in f32.
    z = x + out
    mu = jnp.mean(z, axis=-1, keepdims=True)
    var = jnp.mean(jnp.square(z - mu), axis=-1, keepdims=True)
    o_ref[...] = ((z - mu) * jax.lax.rsqrt(var + eps) * g_ref[...] + beta_ref[...]
                  ).astype(o_ref.dtype)


def mha_block(x_bf, kv_bf, ap, gamma, beta, nhead):
    """x_bf, kv_bf: (N, L, E) batch-first.  Returns LayerNorm(x + MHA(x, kv, kv))."""
    N, Lq, E = x_bf.shape
    Lk = kv_bf.shape[1]
    Dh = E // nhead
    scale = 1.0 / math.sqrt(Dh)
    Bt = _pick_batch_tile(N, max(Lq, Lk))
    kernel = functools.partial(_mha_ln_kernel, nhead=nhead, scale=scale, eps=1e-5)

    flops = (2 * N * Lq * E * E + 4 * N * Lk * E * E      # q, k, v projections
             + 4 * N * Lq * Lk * E                        # scores + PV
             + 2 * N * Lq * E * E)                        # out projection
    cost = pl.CostEstimate(
        flops=flops,
        transcendentals=N * nhead * Lq * Lk,
        bytes_accessed=4 * N * (2 * Lq + Lk) * E + 2 * 4 * E * E + 4 * 8 * E)

    return pl.pallas_call(
        kernel,
        out_shape=jax.ShapeDtypeStruct((N, Lq, E), jnp.float32),
        grid=(N // Bt,),
        in_specs=[
            pl.BlockSpec((Bt, Lq, E), lambda n: (n, 0, 0)),
            pl.BlockSpec((Bt, Lk, E), lambda n: (n, 0, 0)),
            pl.BlockSpec((E, E), lambda n: (0, 0)),
            pl.BlockSpec((1, E), lambda n: (0, 0)),
            pl.BlockSpec((E, E), lambda n: (0, 0)),
            pl.BlockSpec((1, E), lambda n: (0, 0)),
            pl.BlockSpec((E, E), lambda n: (0, 0)),
            pl.BlockSpec((1, E), lambda n: (0, 0)),
            pl.BlockSpec((E, E), lambda n: (0, 0)),
            pl.BlockSpec((1, E), lambda n: (0, 0)),
            pl.BlockSpec((1, E), lambda n: (0, 0)),
            pl.BlockSpec((1, E), lambda n: (0, 0)),
        ],
        out_specs=pl.BlockSpec((Bt, Lq, E), lambda n: (n, 0, 0)),
        scratch_shapes=[pltpu.VMEM((Bt * Lq, E), jnp.float32)],
        compiler_params=_compiler_params(("parallel",)),
        cost_estimate=cost,
    )(x_bf, kv_bf, ap["wq"], ap["bq"], ap["wk"], ap["bk"], ap["wv"], ap["bv"],
      ap["wo"], ap["bo"], gamma, beta)


# ---------------------------------------------------------------------------
# Fused feed-forward (lin1 + ReLU + lin2) + residual + LayerNorm kernel
# dff is tiled with an 'arbitrary' grid axis + f32 accumulator (v7x VMEM budget).
# ---------------------------------------------------------------------------

def _ffn_ln_kernel(x_ref, w1_ref, b1_ref, w2_ref, b2_ref, g_ref, beta_ref,
                   o_ref, acc_ref, *, eps):
    j = pl.program_id(1)

    @pl.when(j == 0)
    def _():
        acc_ref[...] = jnp.zeros_like(acc_ref)

    x = x_ref[...]                                          # (tm, E) f32 residual
    h = (jnp.dot(x.astype(jnp.bfloat16), w1_ref[...],
                 preferred_element_type=jnp.float32) + b1_ref[...])
    h = jnp.maximum(h, 0.0).astype(jnp.bfloat16)
    acc_ref[...] += jnp.dot(h, w2_ref[...], preferred_element_type=jnp.float32)

    @pl.when(j == pl.num_programs(1) - 1)
    def _():
        z = x + acc_ref[...] + b2_ref[...]
        mu = jnp.mean(z, axis=-1, keepdims=True)
        var = jnp.mean(jnp.square(z - mu), axis=-1, keepdims=True)
        o_ref[...] = ((z - mu) * jax.lax.rsqrt(var + eps) * g_ref[...]
                      + beta_ref[...]).astype(o_ref.dtype)


def ffn_block(x_bf, w1, b1, w2, b2, gamma, beta):
    """x_bf: (N, L, E).  Returns LayerNorm(x + lin2(relu(lin1(x))))."""
    N, L, E = x_bf.shape
    M = N * L
    dff = w1.shape[1]
    x2 = x_bf.reshape(M, E)
    tm = _pick_tile(M, 512, 8, min_steps=2)
    tdff = _pick_tile(dff, 2048, 128)

    cost = pl.CostEstimate(
        flops=4 * M * E * dff, transcendentals=0,
        bytes_accessed=4 * 2 * M * E + 2 * 2 * E * dff + 4 * (dff + 3 * E))

    out = pl.pallas_call(
        functools.partial(_ffn_ln_kernel, eps=1e-5),
        out_shape=jax.ShapeDtypeStruct((M, E), jnp.float32),
        grid=(M // tm, dff // tdff),
        in_specs=[
            pl.BlockSpec((tm, E), lambda i, j: (i, 0)),
            pl.BlockSpec((E, tdff), lambda i, j: (0, j)),
            pl.BlockSpec((1, tdff), lambda i, j: (0, j)),
            pl.BlockSpec((tdff, E), lambda i, j: (j, 0)),
            pl.BlockSpec((1, E), lambda i, j: (0, 0)),
            pl.BlockSpec((1, E), lambda i, j: (0, 0)),
            pl.BlockSpec((1, E), lambda i, j: (0, 0)),
        ],
        out_specs=pl.BlockSpec((tm, E), lambda i, j: (i, 0)),
        scratch_shapes=[pltpu.VMEM((tm, E), jnp.float32)],
        compiler_params=_compiler_params(("parallel", "arbitrary")),
        cost_estimate=cost,
    )(x2, w1, b1, w2, b2, gamma, beta)
    return out.reshape(N, L, E)


# ---------------------------------------------------------------------------
# Tiled output (vocab) projection: y = x @ w + b, lane-dense padded vocab.
# Grid order (vocab-block, row-block): weight column block stays VMEM-resident
# while activation row tiles stream (weight dominates HBM traffic here).
# ---------------------------------------------------------------------------

def _linear_kernel(x_ref, w_ref, b_ref, o_ref):
    y = jnp.dot(x_ref[...].astype(jnp.bfloat16), w_ref[...],
                preferred_element_type=jnp.float32)
    o_ref[...] = (y + b_ref[...]).astype(o_ref.dtype)


def linear_tiled(x, w, b, *, tm_cap=512, tn_cap=512):
    """x: (M, K) f32; w: (K, Npad) bf16; b: (1, Npad) f32. Npad multiple of 128."""
    M, K = x.shape
    Nout = w.shape[1]
    tm = _pick_tile(M, tm_cap, 8, min_steps=2)
    tn = _pick_tile(Nout, tn_cap, 128)

    cost = pl.CostEstimate(
        flops=2 * M * K * Nout, transcendentals=0,
        bytes_accessed=4 * M * K + 2 * K * Nout + 4 * M * Nout + 4 * Nout)

    return pl.pallas_call(
        _linear_kernel,
        out_shape=jax.ShapeDtypeStruct((M, Nout), jnp.float32),
        grid=(Nout // tn, M // tm),
        in_specs=[
            pl.BlockSpec((tm, K), lambda j, i: (i, 0)),
            pl.BlockSpec((K, tn), lambda j, i: (0, j)),
            pl.BlockSpec((1, tn), lambda j, i: (0, j)),
        ],
        out_specs=pl.BlockSpec((tm, tn), lambda j, i: (i, j)),
        compiler_params=_compiler_params(("parallel", "parallel")),
        cost_estimate=cost,
    )(x, w, b)


# ---------------------------------------------------------------------------
# Model glue (plain JAX, batch-first internally)
# ---------------------------------------------------------------------------

def encoder_layer(src_bf, p, nhead):
    x = mha_block(src_bf, src_bf, p["self_attn"], p["norm1_g"], p["norm1_b"], nhead)
    x = ffn_block(x, p["lin1_w"], p["lin1_b"], p["lin2_w"], p["lin2_b"],
                  p["norm2_g"], p["norm2_b"])
    return x


def decoder_layer(tgt_bf, mem_bf, p, nhead):
    x = mha_block(tgt_bf, tgt_bf, p["self_attn"], p["norm1_g"], p["norm1_b"], nhead)
    x = mha_block(x, mem_bf, p["cross_attn"], p["norm2_g"], p["norm2_b"], nhead)
    x = ffn_block(x, p["lin1_w"], p["lin1_b"], p["lin2_w"], p["lin2_b"],
                  p["norm3_g"], p["norm3_b"])
    return x


def make_positional_encoding(max_len, d_model):
    position = jnp.arange(0.0, max_len, dtype=jnp.float32)[:, None]
    div_term = jnp.exp(jnp.arange(0.0, d_model, 2, dtype=jnp.float32)
                       * -(math.log(10000.0) / d_model))
    pe = jnp.zeros((max_len, d_model), jnp.float32)
    pe = pe.at[:, 0::2].set(jnp.sin(position * div_term))
    pe = pe.at[:, 1::2].set(jnp.cos(position * div_term))
    return pe[None]  # (1, max_len, d_model)


def apply_pe_batch_first(x_bf, pe):
    # Faithful to the reference module: in seq-first layout pe is sliced by
    # x.size(1) (the batch dim) and broadcast over the sequence dim.  In our
    # batch-first layout that means batch element n gets pe[0, n] added to
    # every position.  (Reference quirk, reproduced on purpose.)
    N = x_bf.shape[0]
    return x_bf + pe[0, :N][:, None, :]


def wtransformer_forward(params, src_ids, tgt_ids, nhead):
    d_model = params["src_emb"].shape[1]
    sqrt_d = math.sqrt(d_model)

    # Embedding lookups in batch-first layout (ids come in seq-first (S, N)).
    src_bf = jnp.take(params["src_emb"], src_ids.T, axis=0) * sqrt_d   # (N, S, E)
    src_bf = apply_pe_batch_first(src_bf, params["pe"])
    tgt_bf = jnp.take(params["tgt_emb"], tgt_ids.T, axis=0) * sqrt_d   # (N, T, E)
    tgt_bf = apply_pe_batch_first(tgt_bf, params["pe"])

    memory = src_bf
    for lp in params["enc_layers"]:
        memory = encoder_layer(memory, lp, nhead)

    out = tgt_bf
    for lp in params["dec_layers"]:
        out = decoder_layer(out, memory, lp, nhead)

    N, T, E = out.shape
    logits_pad = linear_tiled(out.reshape(N * T, E),
                              params["vocab_w"], params["vocab_b"])
    V = params["tgt_vocab_size"]
    logits = logits_pad[:, :V].reshape(N, T, V)
    return jnp.transpose(logits, (1, 0, 2))   # (T, N, V) seq-first, like PyTorch


# ---------------------------------------------------------------------------
# Deterministic parameter initialization
# (weights stored pre-transposed (K, N) and in bf16 for MXU; biases/LN in f32)
# ---------------------------------------------------------------------------

def init_params(key, *, src_vocab, tgt_vocab, d_model, nhead, dff,
                n_enc, n_dec, max_len=5000):
    keys = iter(jax.random.split(key, 512))

    def nrm(shape, scale=0.02, dtype=jnp.float32):
        return (jax.random.normal(next(keys), shape, jnp.float32) * scale).astype(dtype)

    bf16 = jnp.bfloat16

    def mha_params():
        return dict(
            wq=nrm((d_model, d_model), dtype=bf16), bq=nrm((1, d_model)),
            wk=nrm((d_model, d_model), dtype=bf16), bk=nrm((1, d_model)),
            wv=nrm((d_model, d_model), dtype=bf16), bv=nrm((1, d_model)),
            wo=nrm((d_model, d_model), dtype=bf16), bo=nrm((1, d_model)),
        )

    def enc_layer_params():
        return dict(
            self_attn=mha_params(),
            lin1_w=nrm((d_model, dff), dtype=bf16), lin1_b=nrm((1, dff)),
            lin2_w=nrm((dff, d_model), dtype=bf16), lin2_b=nrm((1, d_model)),
            norm1_g=jnp.ones((1, d_model), jnp.float32),
            norm1_b=jnp.zeros((1, d_model), jnp.float32),
            norm2_g=jnp.ones((1, d_model), jnp.float32),
            norm2_b=jnp.zeros((1, d_model), jnp.float32),
        )

    def dec_layer_params():
        p = enc_layer_params()
        p["cross_attn"] = mha_params()
        p["norm3_g"] = jnp.ones((1, d_model), jnp.float32)
        p["norm3_b"] = jnp.zeros((1, d_model), jnp.float32)
        return p

    # Pad vocab projection once at init so kernel stores are lane-dense.
    vpad = ((tgt_vocab + 127) // 128) * 128
    vocab_w = nrm((d_model, tgt_vocab))
    vocab_b = nrm((1, tgt_vocab))
    vocab_w = jnp.pad(vocab_w, ((0, 0), (0, vpad - tgt_vocab))).astype(bf16)
    vocab_b = jnp.pad(vocab_b, ((0, 0), (0, vpad - tgt_vocab)))

    return dict(
        src_emb=nrm((src_vocab, d_model), scale=1.0),
        tgt_emb=nrm((tgt_vocab, d_model), scale=1.0),
        pe=make_positional_encoding(max_len, d_model),
        enc_layers=[enc_layer_params() for _ in range(n_enc)],
        dec_layers=[dec_layer_params() for _ in range(n_dec)],
        vocab_w=vocab_w,
        vocab_b=vocab_b,
        tgt_vocab_size=tgt_vocab,
    )


# ---------------------------------------------------------------------------

if __name__ == "__main__":
    # Small shapes consistent with the module (seq-first ids: (S, N)).
    S_SRC, S_TGT, N_BATCH = 8, 8, 2
    D_MODEL, NHEAD, DFF = 32, 4, 64
    SRC_VOCAB, TGT_VOCAB = 40, 50
    N_ENC, N_DEC = 2, 2

    root = jax.random.PRNGKey(0)
    pkey, skey, tkey = jax.random.split(root, 3)

    params = init_params(
        pkey, src_vocab=SRC_VOCAB, tgt_vocab=TGT_VOCAB, d_model=D_MODEL,
        nhead=NHEAD, dff=DFF, n_enc=N_ENC, n_dec=N_DEC, max_len=128)

    src_ids = jax.random.randint(skey, (S_SRC, N_BATCH), 0, SRC_VOCAB)
    tgt_ids = jax.random.randint(tkey, (S_TGT, N_BATCH), 0, TGT_VOCAB)

    out = wtransformer_forward(params, src_ids, tgt_ids, NHEAD)
    jax.block_until_ready(out)

    assert out.shape == (S_TGT, N_BATCH, TGT_VOCAB), out.shape
    assert out.dtype == jnp.float32
    assert bool(jnp.all(jnp.isfinite(out)))
    print("KERNEL_OK")
</pallas_src>

<mosaic_0001>
module attributes {stable_mosaic.version = 11 : i64} {
  func.func @_mha_ln_kernel(%arg0: i32, %arg1: memref<1x8x32xf32, #tpu.memory_space<vmem>>, %arg2: memref<1x8x32xf32, #tpu.memory_space<vmem>>, %arg3: memref<32x32xbf16, #tpu.memory_space<vmem>>, %arg4: memref<1x32xf32, #tpu.memory_space<vmem>>, %arg5: memref<32x32xbf16, #tpu.memory_space<vmem>>, %arg6: memref<1x32xf32, #tpu.memory_space<vmem>>, %arg7: memref<32x32xbf16, #tpu.memory_space<vmem>>, %arg8: memref<1x32xf32, #tpu.memory_space<vmem>>, %arg9: memref<32x32xbf16, #tpu.memory_space<vmem>>, %arg10: memref<1x32xf32, #tpu.memory_space<vmem>>, %arg11: memref<1x32xf32, #tpu.memory_space<vmem>>, %arg12: memref<1x32xf32, #tpu.memory_space<vmem>>, %arg13: memref<1x8x32xf32, #tpu.memory_space<vmem>>, %arg14: memref<8x32xf32, #tpu.memory_space<vmem>>) attributes {dimension_semantics = [#tpu.dimension_semantics<parallel>], iteration_bounds = array<i64: 2>, scalar_prefetch = 0 : i64, scratch_operands = 1 : i64, tpu.core_type = #tpu.core_type<tc>, window_params = [{transform_indices = @transform_0, window_bounds = array<i64: 1, 8, 32>}, {transform_indices = @transform_1, window_bounds = array<i64: 1, 8, 32>}, {pipeline_mode = #tpu.pipeline_mode<synchronous>, transform_indices = @transform_2, window_bounds = array<i64: 32, 32>}, {pipeline_mode = #tpu.pipeline_mode<synchronous>, transform_indices = @transform_3, window_bounds = array<i64: 1, 32>}, {pipeline_mode = #tpu.pipeline_mode<synchronous>, transform_indices = @transform_4, window_bounds = array<i64: 32, 32>}, {pipeline_mode = #tpu.pipeline_mode<synchronous>, transform_indices = @transform_5, window_bounds = array<i64: 1, 32>}, {pipeline_mode = #tpu.pipeline_mode<synchronous>, transform_indices = @transform_6, window_bounds = array<i64: 32, 32>}, {pipeline_mode = #tpu.pipeline_mode<synchronous>, transform_indices = @transform_7, window_bounds = array<i64: 1, 32>}, {pipeline_mode = #tpu.pipeline_mode<synchronous>, transform_indices = @transform_8, window_bounds = array<i64: 32, 32>}, {pipeline_mode = #tpu.pipeline_mode<synchronous>, transform_indices = @transform_9, window_bounds = array<i64: 1, 32>}, {pipeline_mode = #tpu.pipeline_mode<synchronous>, transform_indices = @transform_10, window_bounds = array<i64: 1, 32>}, {pipeline_mode = #tpu.pipeline_mode<synchronous>, transform_indices = @transform_11, window_bounds = array<i64: 1, 32>}, {transform_indices = @transform_12, window_bounds = array<i64: 1, 8, 32>}]} {
    %c0 = arith.constant 0 : index
    %c0_0 = arith.constant 0 : index
    %c0_1 = arith.constant 0 : index
    %0 = vector.load %arg1[%c0, %c0_0, %c0_1] : memref<1x8x32xf32, #tpu.memory_space<vmem>>, vector<1x8x32xf32>
    %1 = vector.shape_cast %0 : vector<1x8x32xf32> to vector<8x32xf32>
    %2 = arith.truncf %1 : vector<8x32xf32> to vector<8x32xbf16>
    %c0_2 = arith.constant 0 : index
    %c0_3 = arith.constant 0 : index
    %c0_4 = arith.constant 0 : index
    %3 = vector.load %arg2[%c0_2, %c0_3, %c0_4] : memref<1x8x32xf32, #tpu.memory_space<vmem>>, vector<1x8x32xf32>
    %4 = vector.shape_cast %3 : vector<1x8x32xf32> to vector<8x32xf32>
    %5 = arith.truncf %4 : vector<8x32xf32> to vector<8x32xbf16>
    %c0_5 = arith.constant 0 : index
    %c0_6 = arith.constant 0 : index
    %6 = vector.load %arg3[%c0_5, %c0_6] : memref<32x32xbf16, #tpu.memory_space<vmem>>, vector<32x32xbf16>
    %cst = arith.constant dense<0.000000e+00> : vector<8x32xf32>
    %7 = tpu.matmul %2, %6, %cst {dimension_numbers = #tpu.dot_dimension_numbers<[1], [0], [0], [1], [0, 0, 1, 1], [], []>} : vector<8x32xbf16>, vector<32x32xbf16>, vector<8x32xf32> -> vector<8x32xf32>
    %c0_7 = arith.constant 0 : index
    %c0_8 = arith.constant 0 : index
    %8 = vector.load %arg4[%c0_7, %c0_8] : memref<1x32xf32, #tpu.memory_space<vmem>>, vector<1x32xf32>
    %9 = vector.broadcast %8 : vector<1x32xf32> to vector<8x32xf32>
    %10 = arith.addf %7, %9 : vector<8x32xf32>
    %11 = arith.truncf %10 : vector<8x32xf32> to vector<8x32xbf16>
    %12 = vector.shape_cast %11 : vector<8x32xbf16> to vector<1x8x32xbf16>
    %c0_9 = arith.constant 0 : index
    %c0_10 = arith.constant 0 : index
    %13 = vector.load %arg5[%c0_9, %c0_10] : memref<32x32xbf16, #tpu.memory_space<vmem>>, vector<32x32xbf16>
    %cst_11 = arith.constant dense<0.000000e+00> : vector<8x32xf32>
    %14 = tpu.matmul %5, %13, %cst_11 {dimension_numbers = #tpu.dot_dimension_numbers<[1], [0], [0], [1], [0, 0, 1, 1], [], []>} : vector<8x32xbf16>, vector<32x32xbf16>, vector<8x32xf32> -> vector<8x32xf32>
    %c0_12 = arith.constant 0 : index
    %c0_13 = arith.constant 0 : index
    %15 = vector.load %arg6[%c0_12, %c0_13] : memref<1x32xf32, #tpu.memory_space<vmem>>, vector<1x32xf32>
    %16 = vector.broadcast %15 : vector<1x32xf32> to vector<8x32xf32>
    %17 = arith.addf %14, %16 : vector<8x32xf32>
    %18 = arith.truncf %17 : vector<8x32xf32> to vector<8x32xbf16>
    %19 = vector.shape_cast %18 : vector<8x32xbf16> to vector<1x8x32xbf16>
    %c0_14 = arith.constant 0 : index
    %c0_15 = arith.constant 0 : index
    %20 = vector.load %arg7[%c0_14, %c0_15] : memref<32x32xbf16, #tpu.memory_space<vmem>>, vector<32x32xbf16>
    %cst_16 = arith.constant dense<0.000000e+00> : vector<8x32xf32>
    %21 = tpu.matmul %5, %20, %cst_16 {dimension_numbers = #tpu.dot_dimension_numbers<[1], [0], [0], [1], [0, 0, 1, 1], [], []>} : vector<8x32xbf16>, vector<32x32xbf16>, vector<8x32xf32> -> vector<8x32xf32>
    %c0_17 = arith.constant 0 : index
    %c0_18 = arith.constant 0 : index
    %22 = vector.load %arg8[%c0_17, %c0_18] : memref<1x32xf32, #tpu.memory_space<vmem>>, vector<1x32xf32>
    %23 = vector.broadcast %22 : vector<1x32xf32> to vector<8x32xf32>
    %24 = arith.addf %21, %23 : vector<8x32xf32>
    %25 = arith.truncf %24 : vector<8x32xf32> to vector<8x32xbf16>
    %26 = vector.shape_cast %25 : vector<8x32xbf16> to vector<1x8x32xbf16>
    %27 = vector.extract_strided_slice %12 {offsets = [0, 0, 0], sizes = [1, 8, 8], strides = [1, 1, 1]} : vector<1x8x32xbf16> to vector<1x8x8xbf16>
    %28 = vector.extract_strided_slice %19 {offsets = [0, 0, 0], sizes = [1, 8, 8], strides = [1, 1, 1]} : vector<1x8x32xbf16> to vector<1x8x8xbf16>
    %29 = vector.extract_strided_slice %26 {offsets = [0, 0, 0], sizes = [1, 8, 8], strides = [1, 1, 1]} : vector<1x8x32xbf16> to vector<1x8x8xbf16>
    "tpu.trace_start"() <{level = 10 : i32, message = "bqd,bkd->bqk"}> : () -> ()
    %cst_19 = arith.constant dense<0.000000e+00> : vector<1x8x8xf32>
    %30 = tpu.matmul %27, %28, %cst_19 {dimension_numbers = #tpu.dot_dimension_numbers<[2], [2], [1], [1], [0, 0, 0, 1, 1, 1], [0], [0]>} : vector<1x8x8xbf16>, vector<1x8x8xbf16>, vector<1x8x8xf32> -> vector<1x8x8xf32>
    "tpu.trace_stop"() : () -> ()
    %cst_20 = arith.constant 0.353553385 : f32
    %31 = vector.broadcast %cst_20 : f32 to vector<1x8x8xf32>
    %32 = arith.mulf %30, %31 : vector<1x8x8xf32>
    %cst_21 = arith.constant dense<0xFF800000> : vector<1x8xf32>
    %33 = vector.multi_reduction <maximumf>, %32, %cst_21 [2] : vector<1x8x8xf32> to vector<1x8xf32>
    %34 = vector.shape_cast %33 : vector<1x8xf32> to vector<1x8x1xf32>
    %35 = vector.broadcast %34 : vector<1x8x1xf32> to vector<1x8x8xf32>
    %36 = arith.subf %32, %35 : vector<1x8x8xf32>
    %37 = math.exp %36 : vector<1x8x8xf32>
    %cst_22 = arith.constant dense<0.000000e+00> : vector<1x8xf32>
    %38 = vector.multi_reduction <add>, %37, %cst_22 [2] : vector<1x8x8xf32> to vector<1x8xf32>
    %39 = vector.shape_cast %38 : vector<1x8xf32> to vector<1x8x1xf32>
    %40 = vector.broadcast %39 : vector<1x8x1xf32> to vector<1x8x8xf32>
    %41 = arith.divf %37, %40 : vector<1x8x8xf32>
    %42 = arith.truncf %41 : vector<1x8x8xf32> to vector<1x8x8xbf16>
    "tpu.trace_start"() <{level = 10 : i32, message = "bqk,bkd->bqd"}> : () -> ()
    %cst_23 = arith.constant dense<0.000000e+00> : vector<1x8x8xf32>
    %43 = tpu.matmul %42, %29, %cst_23 {dimension_numbers = #tpu.dot_dimension_numbers<[2], [1], [1], [2], [0, 0, 0, 1, 1, 2], [0], [0]>} : vector<1x8x8xbf16>, vector<1x8x8xbf16>, vector<1x8x8xf32> -> vector<1x8x8xf32>
    "tpu.trace_stop"() : () -> ()
    %44 = vector.shape_cast %43 : vector<1x8x8xf32> to vector<8x8xf32>
    %c0_24 = arith.constant 0 : index
    %c0_25 = arith.constant 0 : index
    %45 = vector.load %arg14[%c0_24, %c0_25] : memref<8x32xf32, #tpu.memory_space<vmem>>, vector<8x8xf32>
    tpu.vector_store %arg14[%c0_24, %c0_25], %44 {strides = array<i32>} : memref<8x32xf32, #tpu.memory_space<vmem>>, vector<8x8xf32>,
    %46 = vector.extract_strided_slice %12 {offsets = [0, 0, 8], sizes = [1, 8, 8], strides = [1, 1, 1]} : vector<1x8x32xbf16> to vector<1x8x8xbf16>
    %47 = vector.extract_strided_slice %19 {offsets = [0, 0, 8], sizes = [1, 8, 8], strides = [1, 1, 1]} : vector<1x8x32xbf16> to vector<1x8x8xbf16>
    %48 = vector.extract_strided_slice %26 {offsets = [0, 0, 8], sizes = [1, 8, 8], strides = [1, 1, 1]} : vector<1x8x32xbf16> to vector<1x8x8xbf16>
    "tpu.trace_start"() <{level = 10 : i32, message = "bqd,bkd->bqk"}> : () -> ()
    %cst_26 = arith.constant dense<0.000000e+00> : vector<1x8x8xf32>
    %49 = tpu.matmul %46, %47, %cst_26 {dimension_numbers = #tpu.dot_dimension_numbers<[2], [2], [1], [1], [0, 0, 0, 1, 1, 1], [0], [0]>} : vector<1x8x8xbf16>, vector<1x8x8xbf16>, vector<1x8x8xf32> -> vector<1x8x8xf32>
    "tpu.trace_stop"() : () -> ()
    %cst_27 = arith.constant 0.353553385 : f32
    %50 = vector.broadcast %cst_27 : f32 to vector<1x8x8xf32>
    %51 = arith.mulf %49, %50 : vector<1x8x8xf32>
    %cst_28 = arith.constant dense<0xFF800000> : vector<1x8xf32>
    %52 = vector.multi_reduction <maximumf>, %51, %cst_28 [2] : vector<1x8x8xf32> to vector<1x8xf32>
    %53 = vector.shape_cast %52 : vector<1x8xf32> to vector<1x8x1xf32>
    %54 = vector.broadcast %53 : vector<1x8x1xf32> to vector<1x8x8xf32>
    %55 = arith.subf %51, %54 : vector<1x8x8xf32>
    %56 = math.exp %55 : vector<1x8x8xf32>
    %cst_29 = arith.constant dense<0.000000e+00> : vector<1x8xf32>
    %57 = vector.multi_reduction <add>, %56, %cst_29 [2] : vector<1x8x8xf32> to vector<1x8xf32>
    %58 = vector.shape_cast %57 : vector<1x8xf32> to vector<1x8x1xf32>
    %59 = vector.broadcast %58 : vector<1x8x1xf32> to vector<1x8x8xf32>
    %60 = arith.divf %56, %59 : vector<1x8x8xf32>
    %61 = arith.truncf %60 : vector<1x8x8xf32> to vector<1x8x8xbf16>
    "tpu.trace_start"() <{level = 10 : i32, message = "bqk,bkd->bqd"}> : () -> ()
    %cst_30 = arith.constant dense<0.000000e+00> : vector<1x8x8xf32>
    %62 = tpu.matmul %61, %48, %cst_30 {dimension_numbers = #tpu.dot_dimension_numbers<[2], [1], [1], [2], [0, 0, 0, 1, 1, 2], [0], [0]>} : vector<1x8x8xbf16>, vector<1x8x8xbf16>, vector<1x8x8xf32> -> vector<1x8x8xf32>
    "tpu.trace_stop"() : () -> ()
    %63 = vector.shape_cast %62 : vector<1x8x8xf32> to vector<8x8xf32>
    %c0_31 = arith.constant 0 : index
    %c8 = arith.constant 8 : index
    %64 = vector.load %arg14[%c0_31, %c8] : memref<8x32xf32, #tpu.memory_space<vmem>>, vector<8x8xf32>
    tpu.vector_store %arg14[%c0_31, %c8], %63 {strides = array<i32>} : memref<8x32xf32, #tpu.memory_space<vmem>>, vector<8x8xf32>,
    %65 = vector.extract_strided_slice %12 {offsets = [0, 0, 16], sizes = [1, 8, 8], strides = [1, 1, 1]} : vector<1x8x32xbf16> to vector<1x8x8xbf16>
    %66 = vector.extract_strided_slice %19 {offsets = [0, 0, 16], sizes = [1, 8, 8], strides = [1, 1, 1]} : vector<1x8x32xbf16> to vector<1x8x8xbf16>
    %67 = vector.extract_strided_slice %26 {offsets = [0, 0, 16], sizes = [1, 8, 8], strides = [1, 1, 1]} : vector<1x8x32xbf16> to vector<1x8x8xbf16>
    "tpu.trace_start"() <{level = 10 : i32, message = "bqd,bkd->bqk"}> : () -> ()
    %cst_32 = arith.constant dense<0.000000e+00> : vector<1x8x8xf32>
    %68 = tpu.matmul %65, %66, %cst_32 {dimension_numbers = #tpu.dot_dimension_numbers<[2], [2], [1], [1], [0, 0, 0, 1, 1, 1], [0], [0]>} : vector<1x8x8xbf16>, vector<1x8x8xbf16>, vector<1x8x8xf32> -> vector<1x8x8xf32>
    "tpu.trace_stop"() : () -> ()
    %cst_33 = arith.constant 0.353553385 : f32
    %69 = vector.broadcast %cst_33 : f32 to vector<1x8x8xf32>
    %70 = arith.mulf %68, %69 : vector<1x8x8xf32>
    %cst_34 = arith.constant dense<0xFF800000> : vector<1x8xf32>
    %71 = vector.multi_reduction <maximumf>, %70, %cst_34 [2] : vector<1x8x8xf32> to vector<1x8xf32>
    %72 = vector.shape_cast %71 : vector<1x8xf32> to vector<1x8x1xf32>
    %73 = vector.broadcast %72 : vector<1x8x1xf32> to vector<1x8x8xf32>
    %74 = arith.subf %70, %73 : vector<1x8x8xf32>
    %75 = math.exp %74 : vector<1x8x8xf32>
    %cst_35 = arith.constant dense<0.000000e+00> : vector<1x8xf32>
    %76 = vector.multi_reduction <add>, %75, %cst_35 [2] : vector<1x8x8xf32> to vector<1x8xf32>
    %77 = vector.shape_cast %76 : vector<1x8xf32> to vector<1x8x1xf32>
    %78 = vector.broadcast %77 : vector<1x8x1xf32> to vector<1x8x8xf32>
    %79 = arith.divf %75, %78 : vector<1x8x8xf32>
    %80 = arith.truncf %79 : vector<1x8x8xf32> to vector<1x8x8xbf16>
    "tpu.trace_start"() <{level = 10 : i32, message = "bqk,bkd->bqd"}> : () -> ()
    %cst_36 = arith.constant dense<0.000000e+00> : vector<1x8x8xf32>
    %81 = tpu.matmul %80, %67, %cst_36 {dimension_numbers = #tpu.dot_dimension_numbers<[2], [1], [1], [2], [0, 0, 0, 1, 1, 2], [0], [0]>} : vector<1x8x8xbf16>, vector<1x8x8xbf16>, vector<1x8x8xf32> -> vector<1x8x8xf32>
    "tpu.trace_stop"() : () -> ()
    %82 = vector.shape_cast %81 : vector<1x8x8xf32> to vector<8x8xf32>
    %c0_37 = arith.constant 0 : index
    %c16 = arith.constant 16 : index
    %83 = vector.load %arg14[%c0_37, %c16] : memref<8x32xf32, #tpu.memory_space<vmem>>, vector<8x8xf32>
    tpu.vector_store %arg14[%c0_37, %c16], %82 {strides = array<i32>} : memref<8x32xf32, #tpu.memory_space<vmem>>, vector<8x8xf32>,
    %84 = vector.extract_strided_slice %12 {offsets = [0, 0, 24], sizes = [1, 8, 8], strides = [1, 1, 1]} : vector<1x8x32xbf16> to vector<1x8x8xbf16>
    %85 = vector.extract_strided_slice %19 {offsets = [0, 0, 24], sizes = [1, 8, 8], strides = [1, 1, 1]} : vector<1x8x32xbf16> to vector<1x8x8xbf16>
    %86 = vector.extract_strided_slice %26 {offsets = [0, 0, 24], sizes = [1, 8, 8], strides = [1, 1, 1]} : vector<1x8x32xbf16> to vector<1x8x8xbf16>
    "tpu.trace_start"() <{level = 10 : i32, message = "bqd,bkd->bqk"}> : () -> ()
    %cst_38 = arith.constant dense<0.000000e+00> : vector<1x8x8xf32>
    %87 = tpu.matmul %84, %85, %cst_38 {dimension_numbers = #tpu.dot_dimension_numbers<[2], [2], [1], [1], [0, 0, 0, 1, 1, 1], [0], [0]>} : vector<1x8x8xbf16>, vector<1x8x8xbf16>, vector<1x8x8xf32> -> vector<1x8x8xf32>
    "tpu.trace_stop"() : () -> ()
    %cst_39 = arith.constant 0.353553385 : f32
    %88 = vector.broadcast %cst_39 : f32 to vector<1x8x8xf32>
    %89 = arith.mulf %87, %88 : vector<1x8x8xf32>
    %cst_40 = arith.constant dense<0xFF800000> : vector<1x8xf32>
    %90 = vector.multi_reduction <maximumf>, %89, %cst_40 [2] : vector<1x8x8xf32> to vector<1x8xf32>
    %91 = vector.shape_cast %90 : vector<1x8xf32> to vector<1x8x1xf32>
    %92 = vector.broadcast %91 : vector<1x8x1xf32> to vector<1x8x8xf32>
    %93 = arith.subf %89, %92 : vector<1x8x8xf32>
    %94 = math.exp %93 : vector<1x8x8xf32>
    %cst_41 = arith.constant dense<0.000000e+00> : vector<1x8xf32>
    %95 = vector.multi_reduction <add>, %94, %cst_41 [2] : vector<1x8x8xf32> to vector<1x8xf32>
    %96 = vector.shape_cast %95 : vector<1x8xf32> to vector<1x8x1xf32>
    %97 = vector.broadcast %96 : vector<1x8x1xf32> to vector<1x8x8xf32>
    %98 = arith.divf %94, %97 : vector<1x8x8xf32>
    %99 = arith.truncf %98 : vector<1x8x8xf32> to vector<1x8x8xbf16>
    "tpu.trace_start"() <{level = 10 : i32, message = "bqk,bkd->bqd"}> : () -> ()
    %cst_42 = arith.constant dense<0.000000e+00> : vector<1x8x8xf32>
    %100 = tpu.matmul %99, %86, %cst_42 {dimension_numbers = #tpu.dot_dimension_numbers<[2], [1], [1], [2], [0, 0, 0, 1, 1, 2], [0], [0]>} : vector<1x8x8xbf16>, vector<1x8x8xbf16>, vector<1x8x8xf32> -> vector<1x8x8xf32>
    "tpu.trace_stop"() : () -> ()
    %101 = vector.shape_cast %100 : vector<1x8x8xf32> to vector<8x8xf32>
    %c0_43 = arith.constant 0 : index
    %c24 = arith.constant 24 : index
    %102 = vector.load %arg14[%c0_43, %c24] : memref<8x32xf32, #tpu.memory_space<vmem>>, vector<8x8xf32>
    tpu.vector_store %arg14[%c0_43, %c24], %101 {strides = array<i32>} : memref<8x32xf32, #tpu.memory_space<vmem>>, vector<8x8xf32>,
    %c0_44 = arith.constant 0 : index
    %c0_45 = arith.constant 0 : index
    %103 = vector.load %arg14[%c0_44, %c0_45] : memref<8x32xf32, #tpu.memory_space<vmem>>, vector<8x32xf32>
    %104 = arith.truncf %103 : vector<8x32xf32> to vector<8x32xbf16>
    %c0_46 = arith.constant 0 : index
    %c0_47 = arith.constant 0 : index
    %105 = vector.load %arg9[%c0_46, %c0_47] : memref<32x32xbf16, #tpu.memory_space<vmem>>, vector<32x32xbf16>
    %cst_48 = arith.constant dense<0.000000e+00> : vector<8x32xf32>
    %106 = tpu.matmul %104, %105, %cst_48 {dimension_numbers = #tpu.dot_dimension_numbers<[1], [0], [0], [1], [0, 0, 1, 1], [], []>} : vector<8x32xbf16>, vector<32x32xbf16>, vector<8x32xf32> -> vector<8x32xf32>
    %c0_49 = arith.constant 0 : index
    %c0_50 = arith.constant 0 : index
    %107 = vector.load %arg10[%c0_49, %c0_50] : memref<1x32xf32, #tpu.memory_space<vmem>>, vector<1x32xf32>
    %108 = vector.broadcast %107 : vector<1x32xf32> to vector<8x32xf32>
    %109 = arith.addf %106, %108 : vector<8x32xf32>
    %110 = vector.shape_cast %109 : vector<8x32xf32> to vector<1x8x32xf32>
    %111 = arith.addf %0, %110 : vector<1x8x32xf32>
    %cst_51 = arith.constant dense<0.000000e+00> : vector<1x8xf32>
    %112 = vector.multi_reduction <add>, %111, %cst_51 [2] : vector<1x8x32xf32> to vector<1x8xf32>
    %113 = vector.shape_cast %112 : vector<1x8xf32> to vector<1x8x1xf32>
    %cst_52 = arith.constant 3.200000e+01 : f32
    %114 = vector.broadcast %cst_52 : f32 to vector<1x8x1xf32>
    %115 = arith.divf %113, %114 : vector<1x8x1xf32>
    %116 = vector.broadcast %115 : vector<1x8x1xf32> to vector<1x8x32xf32>
    %117 = arith.subf %111, %116 : vector<1x8x32xf32>
    %118 = arith.mulf %117, %117 : vector<1x8x32xf32>
    %cst_53 = arith.constant dense<0.000000e+00> : vector<1x8xf32>
    %119 = vector.multi_reduction <add>, %118, %cst_53 [2] : vector<1x8x32xf32> to vector<1x8xf32>
    %120 = vector.shape_cast %119 : vector<1x8xf32> to vector<1x8x1xf32>
    %cst_54 = arith.constant 3.200000e+01 : f32
    %121 = vector.broadcast %cst_54 : f32 to vector<1x8x1xf32>
    %122 = arith.divf %120, %121 : vector<1x8x1xf32>
    %123 = vector.broadcast %115 : vector<1x8x1xf32> to vector<1x8x32xf32>
    %124 = arith.subf %111, %123 : vector<1x8x32xf32>
    %cst_55 = arith.constant 9.99999974E-6 : f32
    %125 = vector.broadcast %cst_55 : f32 to vector<1x8x1xf32>
    %126 = arith.addf %122, %125 : vector<1x8x1xf32>
    %127 = math.rsqrt %126 : vector<1x8x1xf32>
    %128 = vector.broadcast %127 : vector<1x8x1xf32> to vector<1x8x32xf32>
    %129 = arith.mulf %124, %128 : vector<1x8x32xf32>
    %c0_56 = arith.constant 0 : index
    %c0_57 = arith.constant 0 : index
    %130 = vector.load %arg11[%c0_56, %c0_57] : memref<1x32xf32, #tpu.memory_space<vmem>>, vector<1x32xf32>
    %131 = vector.shape_cast %130 : vector<1x32xf32> to vector<1x1x32xf32>
    %132 = vector.broadcast %131 : vector<1x1x32xf32> to vector<1x8x32xf32>
    %133 = arith.mulf %129, %132 : vector<1x8x32xf32>
    %c0_58 = arith.constant 0 : index
    %c0_59 = arith.constant 0 : index
    %134 = vector.load %arg12[%c0_58, %c0_59] : memref<1x32xf32, #tpu.memory_space<vmem>>, vector<1x32xf32>
    %135 = vector.shape_cast %134 : vector<1x32xf32> to vector<1x1x32xf32>
    %136 = vector.broadcast %135 : vector<1x1x32xf32> to vector<1x8x32xf32>
    %137 = arith.addf %133, %136 : vector<1x8x32xf32>
    %c0_60 = arith.constant 0 : index
    %c0_61 = arith.constant 0 : index
    %c0_62 = arith.constant 0 : index
    %138 = vector.load %arg13[%c0_60, %c0_61, %c0_62] : memref<1x8x32xf32, #tpu.memory_space<vmem>>, vector<1x8x32xf32>
    tpu.vector_store %arg13[%c0_60, %c0_61, %c0_62], %137 {strides = array<i32>} : memref<1x8x32xf32, #tpu.memory_space<vmem>>, vector<1x8x32xf32>,
    return
  }
  func.func @transform_0(%arg0: i32) -> (i32, i32, i32) {
    %c0_i32 = arith.constant 0 : i32
    %c0_i32_0 = arith.constant 0 : i32
    %c0_i32_1 = arith.constant 0 : i32
    return %arg0, %c0_i32, %c0_i32_0 : i32, i32, i32
  }
  func.func @transform_1(%arg0: i32) -> (i32, i32, i32) {
    %c0_i32 = arith.constant 0 : i32
    %c0_i32_0 = arith.constant 0 : i32
    %c0_i32_1 = arith.constant 0 : i32
    return %arg0, %c0_i32, %c0_i32_0 : i32, i32, i32
  }
  func.func @transform_2(%arg0: i32) -> (i32, i32) {
    %c0_i32 = arith.constant 0 : i32
    %c0_i32_0 = arith.constant 0 : i32
    %c0_i32_1 = arith.constant 0 : i32
    return %c0_i32, %c0_i32_0 : i32, i32
  }
  func.func @transform_3(%arg0: i32) -> (i32, i32) {
    %c0_i32 = arith.constant 0 : i32
    %c0_i32_0 = arith.constant 0 : i32
    %c0_i32_1 = arith.constant 0 : i32
    return %c0_i32, %c0_i32_0 : i32, i32
  }
  func.func @transform_4(%arg0: i32) -> (i32, i32) {
    %c0_i32 = arith.constant 0 : i32
    %c0_i32_0 = arith.constant 0 : i32
    %c0_i32_1 = arith.constant 0 : i32
    return %c0_i32, %c0_i32_0 : i32, i32
  }
  func.func @transform_5(%arg0: i32) -> (i32, i32) {
    %c0_i32 = arith.constant 0 : i32
    %c0_i32_0 = arith.constant 0 : i32
    %c0_i32_1 = arith.constant 0 : i32
    return %c0_i32, %c0_i32_0 : i32, i32
  }
  func.func @transform_6(%arg0: i32) -> (i32, i32) {
    %c0_i32 = arith.constant 0 : i32
    %c0_i32_0 = arith.constant 0 : i32
    %c0_i32_1 = arith.constant 0 : i32
    return %c0_i32, %c0_i32_0 : i32, i32
  }
  func.func @transform_7(%arg0: i32) -> (i32, i32) {
    %c0_i32 = arith.constant 0 : i32
    %c0_i32_0 = arith.constant 0 : i32
    %c0_i32_1 = arith.constant 0 : i32
    return %c0_i32, %c0_i32_0 : i32, i32
  }
  func.func @transform_8(%arg0: i32) -> (i32, i32) {
    %c0_i32 = arith.constant 0 : i32
    %c0_i32_0 = arith.constant 0 : i32
    %c0_i32_1 = arith.constant 0 : i32
    return %c0_i32, %c0_i32_0 : i32, i32
  }
  func.func @transform_9(%arg0: i32) -> (i32, i32) {
    %c0_i32 = arith.constant 0 : i32
    %c0_i32_0 = arith.constant 0 : i32
    %c0_i32_1 = arith.constant 0 : i32
    return %c0_i32, %c0_i32_0 : i32, i32
  }
  func.func @transform_10(%arg0: i32) -> (i32, i32) {
    %c0_i32 = arith.constant 0 : i32
    %c0_i32_0 = arith.constant 0 : i32
    %c0_i32_1 = arith.constant 0 : i32
    return %c0_i32, %c0_i32_0 : i32, i32
  }
  func.func @transform_11(%arg0: i32) -> (i32, i32) {
    %c0_i32 = arith.constant 0 : i32
    %c0_i32_0 = arith.constant 0 : i32
    %c0_i32_1 = arith.constant 0 : i32
    return %c0_i32, %c0_i32_0 : i32, i32
  }
  func.func @transform_12(%arg0: i32) -> (i32, i32, i32) {
    %c0_i32 = arith.constant 0 : i32
    %c0_i32_0 = arith.constant 0 : i32
    %c0_i32_1 = arith.constant 0 : i32
    return %arg0, %c0_i32, %c0_i32_0 : i32, i32, i32
  }
}

</mosaic_0001>

<llo_original>
// kernel: tpu_custom_call.1
$region0: #{tpu_custom_call.1}
  #allocation0 [shape = 'u32[]', space=smem, size = 0x4, offset = 0x4, fixed_abs, tag = 'smem constant byte address 0x4 - core index']
  #allocation1 [shape = 'u32[144,128]{1,0:T(1,128)}', space=vmem, size = 0x12000, scoped, tag = 'internal scratch']
  #allocation2 [shape = 'f32[8,32]{1,0:T(8,128)}', space=vmem, size = 0x1000, scoped, tag = 'scratch operand']
  %s0 = inlined_call_operand.hbm [shape: f32[2,8,32], index: 0, kind: input, shape index: {}]
  %s1 = inlined_call_operand.hbm [shape: f32[2,8,32], index: 1, kind: input, shape index: {}]
  %s2 = inlined_call_operand.hbm [shape: bf16[32,32], index: 2, kind: input, shape index: {}]
  %s3 = inlined_call_operand.vmem [shape: f32[1,32], index: 3, kind: input, shape index: {}]
  %s4 = inlined_call_operand.hbm [shape: bf16[32,32], index: 4, kind: input, shape index: {}]
  %s5 = inlined_call_operand.vmem [shape: f32[1,32], index: 5, kind: input, shape index: {}]
  %s6 = inlined_call_operand.vmem [shape: bf16[32,32], index: 6, kind: input, shape index: {}]
  %s7 = inlined_call_operand.vmem [shape: f32[1,32], index: 7, kind: input, shape index: {}]
  %s8 = inlined_call_operand.hbm [shape: bf16[32,32], index: 8, kind: input, shape index: {}]
  %s9 = inlined_call_operand.vmem [shape: f32[1,32], index: 9, kind: input, shape index: {}]
  %s10 = inlined_call_operand.vmem [shape: f32[1,32], index: 10, kind: input, shape index: {}]
  %s11 = inlined_call_operand.vmem [shape: f32[1,32], index: 11, kind: input, shape index: {}]
  %s12 = inlined_call_operand.hbm [shape: f32[2,8,32], index: 12, kind: output, shape index: {}]
  %s13 = sld [smem:[#allocation0]]
  $region101: #{tpu_custom_call.1} parent=0
    _
  %s15 = ssub.s32 1, %s13
  %s16 = scalar_select 0, %s15, %s13
  $region1: #{tpu_custom_call.1} parent=0
    #allocation3 [shape = 'u8[8192]{0}', space=vmem, size = 0x2000, scoped, tag = 'input window, operand 0']
    #allocation4 [shape = 's32[2]{0}', space=sflag, size = 0x8, scoped, tag = 'scoped memory for tpu_custom_call.1']
    #allocation5 [shape = 's32[2]{0}', space=sflag, size = 0x8, scoped, tag = 'scoped memory for tpu_custom_call.1']
    #allocation6 [shape = 'u8[8192]{0}', space=vmem, size = 0x2000, scoped, tag = 'input window, operand 1']
    #allocation7 [shape = 's32[2]{0}', space=sflag, size = 0x8, scoped, tag = 'scoped memory for tpu_custom_call.1']
    #allocation8 [shape = 'u8[8192]{0}', space=vmem, size = 0x2000, scoped, tag = 'input window, operand 2, single buffered']
    #allocation9 [shape = 'u8[8192]{0}', space=vmem, size = 0x2000, scoped, tag = 'input window, operand 4, single buffered']
    #allocation10 [shape = 's32[1]{0}', space=sflag, size = 0x4, scoped, tag = 'scoped memory for tpu_custom_call.1']
    #allocation11 [shape = 'u8[8192]{0}', space=vmem, size = 0x2000, scoped, tag = 'input window, operand 8, single buffered']
    #allocation12 [shape = 'u8[8192]{0}', space=vmem, size = 0x2000, scoped, tag = 'output window, operand 0']
    %17 = vsyncpa [#allocation4], 0
    %s18 = scalar_lea.sflag [#allocation4], 1
    %19 = vsyncpa %s18, 0
    %20 = vsyncpa [#allocation7], 0
    %s21 = scalar_lea.sflag [#allocation7], 1
    %22 = vsyncpa %s21, 0
    %23 = vsyncpa [#allocation10], 0
    %24 = vsyncpa [#allocation5], 0
    %s25 = scalar_lea.sflag [#allocation5], 1
    %26 = vsyncpa %s25, 0
    loop: start=0, step=1, limit=4
    $region2: #{tpu_custom_call.1} parent=1 // loop_pre_header
      _
    $region3: #{tpu_custom_call.1} parent=1 // loop_header
      %s28 = sphi 0, %s32
      %p29 = scmp.ge.s32.totalorder %s28, 4
      %s38 = sphi 0, %s40
      %s41 = sphi 0, %s38
      %s42 = sphi 0, %s41
      %s58 = sphi 0, %s42
      %s64 = sphi 0, %s66
      %s67 = sphi 0, %s64
      %s68 = sphi 0, %s67
      %s84 = sphi 0, %s68
      %s88 = sphi 0, %s88
      %s90 = sphi 0, %s88
      %s91 = sphi 0, %s90
      %s105 = sphi 0, %s91
      %s109 = sphi 0, %s109
      %s111 = sphi 0, %s109
      %s112 = sphi 0, %s111
      %s126 = sphi 0, %s112
      %s130 = sphi 0, %s130
      %s132 = sphi 0, %s130
      %s133 = sphi 0, %s132
      %s147 = sphi 0, %s133
      %s151 = sphi 0, %s151
      %s153 = sphi 0, %s151
      %s154 = sphi 0, %s153
      %s168 = sphi 0, %s154
      %s172 = sphi 0, %s172
      %s174 = sphi 0, %s172
      %s175 = sphi 0, %s174
      %s189 = sphi 0, %s175
      %s193 = sphi 0, %s193
      %s195 = sphi 0, %s193
      %s196 = sphi 0, %s195
      %s210 = sphi 0, %s196
      %s214 = sphi 0, %s214
      %s216 = sphi 0, %s214
      %s217 = sphi 0, %s216
      %s231 = sphi 0, %s217
      %s235 = sphi 0, %s235
      %s237 = sphi 0, %s235
      %s238 = sphi 0, %s237
      %s252 = sphi 0, %s238
      %s256 = sphi 0, %s256
      %s258 = sphi 0, %s256
      %s259 = sphi 0, %s258
      %s273 = sphi 0, %s259
      %s277 = sphi 0, %s277
      %s279 = sphi 0, %s277
      %s280 = sphi 0, %s279
      %s294 = sphi 0, %s280
      %s300 = sphi 0, %s302
      %s303 = sphi 0, %s300
      %s304 = sphi 0, %s303
      %s320 = sphi 0, %s304
    $region4: #{tpu_custom_call.1} parent=1 // loop_header_branch
      %31 = sbr.rel (%p29) target = $region8
    $region5: #{tpu_custom_call.1} parent=1 // loop_body
      %s33 = ssub.s32 %s28, 1
      %s34 = ssub.s32 %s28, 2
      %s35 = sadd.s32 %s28, 1
      %s36 = ssub.s32 %s28, %s35
      %p37 = scmp.eq.s32.totalorder %s36, 0
      %s39 = sadd.s32 %s38, 1
      %s40 = scalar_select %p37, %s38, %s39
      %p43 = pneg %p37
      %p44 = scmp.eq.s32.totalorder %s28, 1
      %p45 = por %p43, %p44
      %p46 = scmp.ne.s32.totalorder %s38, %s41
      %p47 = scmp.eq.s32.totalorder %s28, 0
      %p48 = por %p46, %p47
      %p49 = scmp.ne.s32.totalorder %s38, %s41
      %p50 = scmp.eq.s32.totalorder %s33, 1
      %p51 = por %p49, %p50
      %p52 = scmp.ne.s32.totalorder %s41, %s42
      %p53 = scmp.eq.s32.totalorder %s33, 0
      %p54 = por %p52, %p53
      %p55 = scmp.ne.s32.totalorder %s41, %s42
      %p56 = scmp.eq.s32.totalorder %s34, 1
      %p57 = por %p55, %p56
      %p59 = scmp.ne.s32.totalorder %s42, %s58
      %p60 = scmp.eq.s32.totalorder %s34, 0
      %p61 = por %p59, %p60
      %s62 = ssub.s32 %s28, %s35
      %p63 = scmp.eq.s32.totalorder %s62, 0
      %s65 = sadd.s32 %s64, 1
      %s66 = scalar_select %p63, %s64, %s65
      %p69 = pneg %p63
      %p70 = scmp.eq.s32.totalorder %s28, 1
      %p71 = por %p69, %p70
      %p72 = scmp.ne.s32.totalorder %s64, %s67
      %p73 = scmp.eq.s32.totalorder %s28, 0
      %p74 = por %p72, %p73
      %p75 = scmp.ne.s32.totalorder %s64, %s67
      %p76 = scmp.eq.s32.totalorder %s33, 1
      %p77 = por %p75, %p76
      %p78 = scmp.ne.s32.totalorder %s67, %s68
      %p79 = scmp.eq.s32.totalorder %s33, 0
      %p80 = por %p78, %p79
      %p81 = scmp.ne.s32.totalorder %s67, %s68
      %p82 = scmp.eq.s32.totalorder %s34, 1
      %p83 = por %p81, %p82
      %p85 = scmp.ne.s32.totalorder %s68, %s84
      %p86 = scmp.eq.s32.totalorder %s34, 0
      %p87 = por %p85, %p86
      %s89 = sadd.s32 %s88, 1
      %p92 = scmp.eq.s32.totalorder %s28, 1
      %p93 = scmp.ne.s32.totalorder %s88, %s90
      %p94 = scmp.eq.s32.totalorder %s28, 0
      %p95 = por %p93, %p94
      %p96 = scmp.ne.s32.totalorder %s88, %s90
      %p97 = scmp.eq.s32.totalorder %s33, 1
      %p98 = por %p96, %p97
      %p99 = scmp.ne.s32.totalorder %s90, %s91
      %p100 = scmp.eq.s32.totalorder %s33, 0
      %p101 = por %p99, %p100
      %p102 = scmp.ne.s32.totalorder %s90, %s91
      %p103 = scmp.eq.s32.totalorder %s34, 1
      %p104 = por %p102, %p103
      %p106 = scmp.ne.s32.totalorder %s91, %s105
      %p107 = scmp.eq.s32.totalorder %s34, 0
      %p108 = por %p106, %p107
      %s110 = sadd.s32 %s109, 1
      %p113 = scmp.eq.s32.totalorder %s28, 1
      %p114 = scmp.ne.s32.totalorder %s109, %s111
      %p115 = scmp.eq.s32.totalorder %s28, 0
      %p116 = por %p114, %p115
      %p117 = scmp.ne.s32.totalorder %s109, %s111
      %p118 = scmp.eq.s32.totalorder %s33, 1
      %p119 = por %p117, %p118
      %p120 = scmp.ne.s32.totalorder %s111, %s112
      %p121 = scmp.eq.s32.totalorder %s33, 0
      %p122 = por %p120, %p121
      %p123 = scmp.ne.s32.totalorder %s111, %s112
      %p124 = scmp.eq.s32.totalorder %s34, 1
      %p125 = por %p123, %p124
      %p127 = scmp.ne.s32.totalorder %s112, %s126
      %p128 = scmp.eq.s32.totalorder %s34, 0
      %p129 = por %p127, %p128
      %s131 = sadd.s32 %s130, 1
      %p134 = scmp.eq.s32.totalorder %s28, 1
      %p135 = scmp.ne.s32.totalorder %s130, %s132
      %p136 = scmp.eq.s32.totalorder %s28, 0
      %p137 = por %p135, %p136
      %p138 = scmp.ne.s32.totalorder %s130, %s132
      %p139 = scmp.eq.s32.totalorder %s33, 1
      %p140 = por %p138, %p139
      %p141 = scmp.ne.s32.totalorder %s132, %s133
      %p142 = scmp.eq.s32.totalorder %s33, 0
      %p143 = por %p141, %p142
      %p144 = scmp.ne.s32.totalorder %s132, %s133
      %p145 = scmp.eq.s32.totalorder %s34, 1
      %p146 = por %p144, %p145
      %p148 = scmp.ne.s32.totalorder %s133, %s147
      %p149 = scmp.eq.s32.totalorder %s34, 0
      %p150 = por %p148, %p149
      %s152 = sadd.s32 %s151, 1
      %p155 = scmp.eq.s32.totalorder %s28, 1
      %p156 = scmp.ne.s32.totalorder %s151, %s153
      %p157 = scmp.eq.s32.totalorder %s28, 0
      %p158 = por %p156, %p157
      %p159 = scmp.ne.s32.totalorder %s151, %s153
      %p160 = scmp.eq.s32.totalorder %s33, 1
      %p161 = por %p159, %p160
      %p162 = scmp.ne.s32.totalorder %s153, %s154
      %p163 = scmp.eq.s32.totalorder %s33, 0
      %p164 = por %p162, %p163
      %p165 = scmp.ne.s32.totalorder %s153, %s154
      %p166 = scmp.eq.s32.totalorder %s34, 1
      %p167 = por %p165, %p166
      %p169 = scmp.ne.s32.totalorder %s154, %s168
      %p170 = scmp.eq.s32.totalorder %s34, 0
      %p171 = por %p169, %p170
      %s173 = sadd.s32 %s172, 1
      %p176 = scmp.eq.s32.totalorder %s28, 1
      %p177 = scmp.ne.s32.totalorder %s172, %s174
      %p178 = scmp.eq.s32.totalorder %s28, 0
      %p179 = por %p177, %p178
      %p180 = scmp.ne.s32.totalorder %s172, %s174
      %p181 = scmp.eq.s32.totalorder %s33, 1
      %p182 = por %p180, %p181
      %p183 = scmp.ne.s32.totalorder %s174, %s175
      %p184 = scmp.eq.s32.totalorder %s33, 0
      %p185 = por %p183, %p184
      %p186 = scmp.ne.s32.totalorder %s174, %s175
      %p187 = scmp.eq.s32.totalorder %s34, 1
      %p188 = por %p186, %p187
      %p190 = scmp.ne.s32.totalorder %s175, %s189
      %p191 = scmp.eq.s32.totalorder %s34, 0
      %p192 = por %p190, %p191
      %s194 = sadd.s32 %s193, 1
      %p197 = scmp.eq.s32.totalorder %s28, 1
      %p198 = scmp.ne.s32.totalorder %s193, %s195
      %p199 = scmp.eq.s32.totalorder %s28, 0
      %p200 = por %p198, %p199
      %p201 = scmp.ne.s32.totalorder %s193, %s195
      %p202 = scmp.eq.s32.totalorder %s33, 1
      %p203 = por %p201, %p202
      %p204 = scmp.ne.s32.totalorder %s195, %s196
      %p205 = scmp.eq.s32.totalorder %s33, 0
      %p206 = por %p204, %p205
      %p207 = scmp.ne.s32.totalorder %s195, %s196
      %p208 = scmp.eq.s32.totalorder %s34, 1
      %p209 = por %p207, %p208
      %p211 = scmp.ne.s32.totalorder %s196, %s210
      %p212 = scmp.eq.s32.totalorder %s34, 0
      %p213 = por %p211, %p212
      %s215 = sadd.s32 %s214, 1
      %p218 = scmp.eq.s32.totalorder %s28, 1
      %p219 = scmp.ne.s32.totalorder %s214, %s216
      %p220 = scmp.eq.s32.totalorder %s28, 0
      %p221 = por %p219, %p220
      %p222 = scmp.ne.s32.totalorder %s214, %s216
      %p223 = scmp.eq.s32.totalorder %s33, 1
      %p224 = por %p222, %p223
      %p225 = scmp.ne.s32.totalorder %s216, %s217
      %p226 = scmp.eq.s32.totalorder %s33, 0
      %p227 = por %p225, %p226
      %p228 = scmp.ne.s32.totalorder %s216, %s217
      %p229 = scmp.eq.s32.totalorder %s34, 1
      %p230 = por %p228, %p229
      %p232 = scmp.ne.s32.totalorder %s217, %s231
      %p233 = scmp.eq.s32.totalorder %s34, 0
      %p234 = por %p232, %p233
      %s236 = sadd.s32 %s235, 1
      %p239 = scmp.eq.s32.totalorder %s28, 1
      %p240 = scmp.ne.s32.totalorder %s235, %s237
      %p241 = scmp.eq.s32.totalorder %s28, 0
      %p242 = por %p240, %p241
      %p243 = scmp.ne.s32.totalorder %s235, %s237
      %p244 = scmp.eq.s32.totalorder %s33, 1
      %p245 = por %p243, %p244
      %p246 = scmp.ne.s32.totalorder %s237, %s238
      %p247 = scmp.eq.s32.totalorder %s33, 0
      %p248 = por %p246, %p247
      %p249 = scmp.ne.s32.totalorder %s237, %s238
      %p250 = scmp.eq.s32.totalorder %s34, 1
      %p251 = por %p249, %p250
      %p253 = scmp.ne.s32.totalorder %s238, %s252
      %p254 = scmp.eq.s32.totalorder %s34, 0
      %p255 = por %p253, %p254
      %s257 = sadd.s32 %s256, 1
      %p260 = scmp.eq.s32.totalorder %s28, 1
      %p261 = scmp.ne.s32.totalorder %s256, %s258
      %p262 = scmp.eq.s32.totalorder %s28, 0
      %p263 = por %p261, %p262
      %p264 = scmp.ne.s32.totalorder %s256, %s258
      %p265 = scmp.eq.s32.totalorder %s33, 1
      %p266 = por %p264, %p265
      %p267 = scmp.ne.s32.totalorder %s258, %s259
      %p268 = scmp.eq.s32.totalorder %s33, 0
      %p269 = por %p267, %p268
      %p270 = scmp.ne.s32.totalorder %s258, %s259
      %p271 = scmp.eq.s32.totalorder %s34, 1
      %p272 = por %p270, %p271
      %p274 = scmp.ne.s32.totalorder %s259, %s273
      %p275 = scmp.eq.s32.totalorder %s34, 0
      %p276 = por %p274, %p275
      %s278 = sadd.s32 %s277, 1
      %p281 = scmp.eq.s32.totalorder %s28, 1
      %p282 = scmp.ne.s32.totalorder %s277, %s279
      %p283 = scmp.eq.s32.totalorder %s28, 0
      %p284 = por %p282, %p283
      %p285 = scmp.ne.s32.totalorder %s277, %s279
      %p286 = scmp.eq.s32.totalorder %s33, 1
      %p287 = por %p285, %p286
      %p288 = scmp.ne.s32.totalorder %s279, %s280
      %p289 = scmp.eq.s32.totalorder %s33, 0
      %p290 = por %p288, %p289
      %p291 = scmp.ne.s32.totalorder %s279, %s280
      %p292 = scmp.eq.s32.totalorder %s34, 1
      %p293 = por %p291, %p292
      %p295 = scmp.ne.s32.totalorder %s280, %s294
      %p296 = scmp.eq.s32.totalorder %s34, 0
      %p297 = por %p295, %p296
      %s298 = ssub.s32 %s28, %s35
      %p299 = scmp.eq.s32.totalorder %s298, 0
      %s301 = sadd.s32 %s300, 1
      %s302 = scalar_select %p299, %s300, %s301
      %p305 = pneg %p299
      %p306 = scmp.eq.s32.totalorder %s28, 1
      %p307 = por %p305, %p306
      %p308 = scmp.ne.s32.totalorder %s300, %s303
      %p309 = scmp.eq.s32.totalorder %s28, 0
      %p310 = por %p308, %p309
      %p311 = scmp.ne.s32.totalorder %s300, %s303
      %p312 = scmp.eq.s32.totalorder %s33, 1
      %p313 = por %p311, %p312
      %p314 = scmp.ne.s32.totalorder %s303, %s304
      %p315 = scmp.eq.s32.totalorder %s33, 0
      %p316 = por %p314, %p315
      %p317 = scmp.ne.s32.totalorder %s303, %s304
      %p318 = scmp.eq.s32.totalorder %s34, 1
      %p319 = por %p317, %p318
      %p321 = scmp.ne.s32.totalorder %s304, %s320
      %p322 = scmp.eq.s32.totalorder %s34, 0
      %p323 = por %p321, %p322
      %p324 = scmp.le.s32.totalorder 1, %s28
      %p325 = scmp.lt.s32.totalorder %s28, 3
      %p326 = pnand %p324, %p325
      %p327 = pneg %p326
      // Predicated region
      $region9: #{tpu_custom_call.1} parent=5 // pred_check
        _
      $region10: #{tpu_custom_call.1} parent=5 // pred_check_branch
        %329 = sbr.rel (%p326) target = $region12
      $region11: #{tpu_custom_call.1} parent=5 // pred_region
        %s330 = ssub.s32 %s28, 1
        // Predicated region
        $region13: #{tpu_custom_call.1} parent=11 // pred_check
          %p331 = pneg %p101
        $region14: #{tpu_custom_call.1} parent=11 // pred_check_branch
          %333 = sbr.rel (%p331) target = $region16
        $region15: #{tpu_custom_call.1} parent=11 // pred_region
          %s335 = ssub.s32 256, 256
          %336 = vsyncadd [#allocation7], %s335
          %s337 = sshll.u32 [#allocation8], 4
          %s338 = int_to_ptr.vmem [resolvable:$true] %s337
          %343 = dma.hbm_to_vmem [thread:$0]  %s2, 256, %s338, [#allocation7], 64, 64, 4
        $region16: #{tpu_custom_call.1} parent=11 // pred_fallthru
          _
        // Predicated region
        $region17: #{tpu_custom_call.1} parent=11 // pred_check
          %p344 = pneg %p122
        $region18: #{tpu_custom_call.1} parent=11 // pred_check_branch
          %346 = sbr.rel (%p344) target = $region20
        $region19: #{tpu_custom_call.1} parent=11 // pred_region
          _
        $region20: #{tpu_custom_call.1} parent=11 // pred_fallthru
          _
        // Predicated region
        $region21: #{tpu_custom_call.1} parent=11 // pred_check
          %p347 = pneg %p143
        $region22: #{tpu_custom_call.1} parent=11 // pred_check_branch
          %349 = sbr.rel (%p347) target = $region24
        $region23: #{tpu_custom_call.1} parent=11 // pred_region
          %s351 = ssub.s32 256, 256
          %352 = vsyncadd [#allocation10], %s351
          %s353 = sshll.u32 [#allocation9], 4
          %s354 = int_to_ptr.vmem [resolvable:$true] %s353
          %359 = dma.hbm_to_vmem [thread:$0]  %s4, 256, %s354, [#allocation10], 64, 64, 4
        $region24: #{tpu_custom_call.1} parent=11 // pred_fallthru
          _
        // Predicated region
        $region25: #{tpu_custom_call.1} parent=11 // pred_check
          %p360 = pneg %p164
        $region26: #{tpu_custom_call.1} parent=11 // pred_check_branch
          %362 = sbr.rel (%p360) target = $region28
        $region27: #{tpu_custom_call.1} parent=11 // pred_region
          _
        $region28: #{tpu_custom_call.1} parent=11 // pred_fallthru
          _
        // Predicated region
        $region29: #{tpu_custom_call.1} parent=11 // pred_check
          %p363 = pneg %p185
        $region30: #{tpu_custom_call.1} parent=11 // pred_check_branch
          %365 = sbr.rel (%p363) target = $region32
        $region31: #{tpu_custom_call.1} parent=11 // pred_region
          _
        $region32: #{tpu_custom_call.1} parent=11 // pred_fallthru
          _
        // Predicated region
        $region33: #{tpu_custom_call.1} parent=11 // pred_check
          %p366 = pneg %p206
        $region34: #{tpu_custom_call.1} parent=11 // pred_check_branch
          %368 = sbr.rel (%p366) target = $region36
        $region35: #{tpu_custom_call.1} parent=11 // pred_region
          _
        $region36: #{tpu_custom_call.1} parent=11 // pred_fallthru
          _
        // Predicated region
        $region37: #{tpu_custom_call.1} parent=11 // pred_check
          %p369 = pneg %p227
        $region38: #{tpu_custom_call.1} parent=11 // pred_check_branch
          %371 = sbr.rel (%p369) target = $region40
        $region39: #{tpu_custom_call.1} parent=11 // pred_region
          %s373 = ssub.s32 256, 256
          %374 = vsyncadd [#allocation10], %s373
          %s375 = sshll.u32 [#allocation11], 4
          %s376 = int_to_ptr.vmem [resolvable:$true] %s375
          %381 = dma.hbm_to_vmem [thread:$0]  %s8, 256, %s376, [#allocation10], 64, 64, 4
        $region40: #{tpu_custom_call.1} parent=11 // pred_fallthru
          _
        // Predicated region
        $region41: #{tpu_custom_call.1} parent=11 // pred_check
          %p382 = pneg %p248
        $region42: #{tpu_custom_call.1} parent=11 // pred_check_branch
          %384 = sbr.rel (%p382) target = $region44
        $region43: #{tpu_custom_call.1} parent=11 // pred_region
          _
        $region44: #{tpu_custom_call.1} parent=11 // pred_fallthru
          _
        // Predicated region
        $region45: #{tpu_custom_call.1} parent=11 // pred_check
          %p385 = pneg %p269
        $region46: #{tpu_custom_call.1} parent=11 // pred_check_branch
          %387 = sbr.rel (%p385) target = $region48
        $region47: #{tpu_custom_call.1} parent=11 // pred_region
          _
        $region48: #{tpu_custom_call.1} parent=11 // pred_fallthru
          _
        // Predicated region
        $region49: #{tpu_custom_call.1} parent=11 // pred_check
          %p388 = pneg %p290
        $region50: #{tpu_custom_call.1} parent=11 // pred_check_branch
          %390 = sbr.rel (%p388) target = $region52
        $region51: #{tpu_custom_call.1} parent=11 // pred_region
          _
        $region52: #{tpu_custom_call.1} parent=11 // pred_fallthru
          _
      $region12: #{tpu_custom_call.1} parent=5 // pred_fallthru
        _
      %p391 = scmp.lt.s32.totalorder %s28, 2
      // Predicated region
      $region53: #{tpu_custom_call.1} parent=5 // pred_check
        %p392 = pneg %p391
      $region54: #{tpu_custom_call.1} parent=5 // pred_check_branch
        %394 = sbr.rel (%p392) target = $region56
      $region55: #{tpu_custom_call.1} parent=5 // pred_region
        // Predicated region
        $region57: #{tpu_custom_call.1} parent=55 // pred_check
          %p395 = pneg %p48
        $region58: #{tpu_custom_call.1} parent=55 // pred_check_branch
          %397 = sbr.rel (%p395) target = $region60
        $region59: #{tpu_custom_call.1} parent=55 // pred_region
          %s398 = sand.u32 %s38, 1
          %s399 = scalar_lea.sflag [#allocation4], %s398
          %s400 = sand.u32 %s38, 1
          %s401 = smul.addr %s400, 8
          %s402 = scalar_lea.vmem [#allocation3], %s401
          %s404 = ssub.s32 128, 128
          %405 = vsyncadd %s399, %s404
          %s406 = smul.addr %s28, 128
          %s407 = scalar_lea.hbm %s0, %s406
          %s409 = sshll.u32 %s402, 4
          %s410 = int_to_ptr.vmem [resolvable:$true] %s409
          %412 = dma.hbm_to_vmem [thread:$0]  %s407, 128, %s410, %s399
        $region60: #{tpu_custom_call.1} parent=55 // pred_fallthru
          _
        // Predicated region
        $region61: #{tpu_custom_call.1} parent=55 // pred_check
          %p413 = pneg %p74
        $region62: #{tpu_custom_call.1} parent=55 // pred_check_branch
          %415 = sbr.rel (%p413) target = $region64
        $region63: #{tpu_custom_call.1} parent=55 // pred_region
          %s416 = sand.u32 %s28, 1
          %s417 = scalar_lea.sflag [#allocation7], %s416
          %s418 = sand.u32 %s64, 1
          %s419 = smul.addr %s418, 8
          %s420 = scalar_lea.vmem [#allocation6], %s419
          %s422 = ssub.s32 128, 128
          %423 = vsyncadd %s417, %s422
          %s424 = smul.addr %s28, 128
          %s425 = scalar_lea.hbm %s1, %s424
          %s427 = sshll.u32 %s420, 4
          %s428 = int_to_ptr.vmem [resolvable:$true] %s427
          %430 = dma.hbm_to_vmem [thread:$0]  %s425, 128, %s428, %s417
        $region64: #{tpu_custom_call.1} parent=55 // pred_fallthru
          _
      $region56: #{tpu_custom_call.1} parent=5 // pred_fallthru
        _
      %p431 = scmp.le.s32.totalorder 1, %s28
      %p432 = scmp.lt.s32.totalorder %s28, 3
      %p433 = pnand %p431, %p432
      %p434 = pneg %p433
      // Predicated region
      $region65: #{tpu_custom_call.1} parent=5 // pred_check
        _
      $region66: #{tpu_custom_call.1} parent=5 // pred_check_branch
        %436 = sbr.rel (%p433) target = $region68
      $region67: #{tpu_custom_call.1} parent=5 // pred_region
        %s437 = ssub.s32 %s28, 1
        %s438 = sand.u32 %s41, 1
        %s439 = scalar_lea.sflag [#allocation4], %s438
        %s440 = sand.u32 %s41, 1
        %s441 = smul.addr %s440, 8
        %s442 = scalar_lea.vmem [#allocation3], %s441
        // Predicated region
        $region69: #{tpu_custom_call.1} parent=67 // pred_check
          %p443 = pneg %p54
        $region70: #{tpu_custom_call.1} parent=67 // pred_check_branch
          %445 = sbr.rel (%p443) target = $region72
        $region71: #{tpu_custom_call.1} parent=67 // pred_region
          %446 = dma.done %s439, 128
        $region72: #{tpu_custom_call.1} parent=67 // pred_fallthru
          _
        %s447 = sand.u32 %s33, 1
        %s448 = scalar_lea.sflag [#allocation7], %s447
        %s449 = sand.u32 %s67, 1
        %s450 = smul.addr %s449, 8
        %s451 = scalar_lea.vmem [#allocation6], %s450
        // Predicated region
        $region73: #{tpu_custom_call.1} parent=67 // pred_check
          %p452 = pneg %p80
        $region74: #{tpu_custom_call.1} parent=67 // pred_check_branch
          %454 = sbr.rel (%p452) target = $region76
        $region75: #{tpu_custom_call.1} parent=67 // pred_region
          %455 = dma.done %s448, 128
        $region76: #{tpu_custom_call.1} parent=67 // pred_fallthru
          _
        // Predicated region
        $region77: #{tpu_custom_call.1} parent=67 // pred_check
          %p456 = pneg %p101
        $region78: #{tpu_custom_call.1} parent=67 // pred_check_branch
          %458 = sbr.rel (%p456) target = $region80
        $region79: #{tpu_custom_call.1} parent=67 // pred_region
          %459 = dma.done [#allocation7], 256
        $region80: #{tpu_custom_call.1} parent=67 // pred_fallthru
          _
        // Predicated region
        $region81: #{tpu_custom_call.1} parent=67 // pred_check
          %p460 = pneg %p143
        $region82: #{tpu_custom_call.1} parent=67 // pred_check_branch
          %462 = sbr.rel (%p460) target = $region84
        $region83: #{tpu_custom_call.1} parent=67 // pred_region
          %463 = dma.done [#allocation10], 256
        $region84: #{tpu_custom_call.1} parent=67 // pred_fallthru
          _
        // Predicated region
        $region85: #{tpu_custom_call.1} parent=67 // pred_check
          %p464 = pneg %p227
        $region86: #{tpu_custom_call.1} parent=67 // pred_check_branch
          %466 = sbr.rel (%p464) target = $region88
        $region87: #{tpu_custom_call.1} parent=67 // pred_region
          %467 = dma.done [#allocation10], 256
        $region88: #{tpu_custom_call.1} parent=67 // pred_fallthru
          _
        %s468 = sand.u32 %s41, 1
        %s469 = scalar_lea.sflag [#allocation4], %s468
        %s470 = sand.u32 %s41, 1
        %s471 = smul.addr %s470, 8
        %s472 = scalar_lea.vmem [#allocation3], %s471
        %p473 = pneg %p54
        %p474 = pneg %p51
        %s475 = sand.u32 %s33, 1
        %s476 = scalar_lea.sflag [#allocation7], %s475
        %s477 = sand.u32 %s67, 1
        %s478 = smul.addr %s477, 8
        %s479 = scalar_lea.vmem [#allocation6], %s478
        %p480 = pneg %p80
        %p481 = pneg %p77
        %p482 = pneg %p101
        %p483 = pneg %p98
        %p484 = pneg %p122
        %p485 = pneg %p119
        %p486 = pneg %p143
        %p487 = pneg %p140
        %p488 = pneg %p164
        %p489 = pneg %p161
        %p490 = pneg %p185
        %p491 = pneg %p182
        %p492 = pneg %p206
        %p493 = pneg %p203
        %p494 = pneg %p227
        %p495 = pneg %p224
        %p496 = pneg %p248
        %p497 = pneg %p245
        %p498 = pneg %p269
        %p499 = pneg %p266
        %p500 = pneg %p290
        %p501 = pneg %p287
        %p502 = pneg %p316
        %p503 = pneg %p313
        %s504 = sand.u32 %s303, 1
        %s505 = scalar_lea.sflag [#allocation5], %s504
        %s506 = sand.u32 %s303, 1
        %s507 = smul.addr %s506, 8
        %s508 = scalar_lea.vmem [#allocation12], %s507
        %v510 = vld [vmem:[%s442] sm:$0xff]
        %v511 = vpack.c.bf16 %v510, %v510
        %v512 = vld [vmem:[%s451] sm:$0xff]
        %v513 = vpack.c.bf16 %v512, %v512
        %v514 = vld [vmem:[#allocation8] sm:$0xf]
        %v515 = vld [vmem:[#allocation8 + $0x4] sm:$0xf]
        %v516 = vld [vmem:[#allocation8 + $0x8] sm:$0xf]
        %v517 = vld [vmem:[#allocation8 + $0xc] sm:$0xf]
        %v518 = vld [vmem:[%s3] sm:$0x1]
        %v520 = vlaneseq
        %v521 = vshrl.u32 %v520, 7
        %v522 = vsub.s32 0, %v521
        %v523 = vrot.slane %v518, %v522
        %v529 = vunpack.c.l.b16 %v514
        %v530 = vunpack.c.l.b16 %v515
        %v531 = vunpack.c.l.b16 %v516
        %v532 = vunpack.c.l.b16 %v517
        %v533 = vpack.c.b16 %v530, %v529
        %v534 = vpack.c.b16 %v532, %v531
        %vm537 = vcmask 261120
        %v539 = vsel %vm537, %v511, 0
        %541 = vmatprep.subr.bf16.mxu0 0
        %542 = vmatpush1.bf16.msra.mxu0 %v533
        %543 = vmatprep.subr.bf16.mxu0 0
        %544 = vmatpush1.bf16.msra.mxu0 %v534
        %545 = vmatprep.subr.bf16.mxu0 0
        %546 = vmatpush1.bf16.msra.mxu0 0
        %547 = vmatprep.subr.bf16.mxu0 0
        %548 = vmatpush1.bf16.msra.mxu0 0
        %549 = vmatprep.subr.bf16.mxu0 0
        %550 = vmatpush1.bf16.msra.mxu0 0
        %551 = vmatprep.subr.bf16.mxu0 0
        %552 = vmatpush1.bf16.msra.mxu0 0
        %553 = vmatprep.subr.bf16.mxu0 0
        %554 = vmatpush1.bf16.msra.mxu0 0
        %555 = vmatprep.subr.bf16.mxu0 0
        %556 = vmatpush1.bf16.msra.mxu0 0
        %557 = vmatprep.subr.bf16.mxu0 0
        %558 = vmatpush1.bf16.msra.mxu0 0
        %559 = vmatprep.subr.bf16.mxu0 0
        %560 = vmatpush1.bf16.msra.mxu0 0
        %561 = vmatprep.subr.bf16.mxu0 0
        %562 = vmatpush1.bf16.msra.mxu0 0
        %563 = vmatprep.subr.bf16.mxu0 0
        %564 = vmatpush1.bf16.msra.mxu0 0
        %565 = vmatprep.subr.bf16.mxu0 0
        %566 = vmatpush1.bf16.msra.mxu0 0
        %567 = vmatprep.subr.bf16.mxu0 0
        %568 = vmatpush1.bf16.msra.mxu0 0
        %569 = vmatprep.subr.bf16.mxu0 0
        %570 = vmatpush1.bf16.msra.mxu0 0
        %571 = vmatprep.subr.bf16.mxu0 0
        %572 = vmatpush1.bf16.msra.mxu0 0
        %573 = vmatprep.mubr.bf16.mxu0 0
        %574 = vmatmul.mubr.bf16.gmra.mrb[0].mxu0 %v539
        %v575 = vpop.f32.mrb[0].mxu0
        %v576 = vadd.f32 %v523, %v575
        %v577 = vpop.f32.mrb[0].mxu0
        %v578 = vpop.f32.mrb[0].mxu0
        %v579 = vpop.f32.mrb[0].mxu0
        %580 = vdwg.mxu0
        %v581 = vpack.c.bf16 %v576, %v576
        %v582 = vld [vmem:[#allocation9] sm:$0xf]
        %v583 = vld [vmem:[#allocation9 + $0x4] sm:$0xf]
        %v584 = vld [vmem:[#allocation9 + $0x8] sm:$0xf]
        %v585 = vld [vmem:[#allocation9 + $0xc] sm:$0xf]
        %v586 = vld [vmem:[%s5] sm:$0x1]
        %v588 = vlaneseq
        %v589 = vshrl.u32 %v588, 7
        %v590 = vsub.s32 0, %v589
        %v591 = vrot.slane %v586, %v590
        %v597 = vunpack.c.l.b16 %v582
        %v598 = vunpack.c.l.b16 %v583
        %v599 = vunpack.c.l.b16 %v584
        %v600 = vunpack.c.l.b16 %v585
        %v601 = vpack.c.b16 %v598, %v597
        %v602 = vpack.c.b16 %v600, %v599
        %v606 = vsel %vm537, %v513, 0
        %608 = vmatprep.subr.bf16.mxu0 0
        %609 = vmatpush1.bf16.msra.mxu0 %v601
        %610 = vmatprep.subr.bf16.mxu0 0
        %611 = vmatpush1.bf16.msra.mxu0 %v602
        %612 = vmatprep.subr.bf16.mxu0 0
        %613 = vmatpush1.bf16.msra.mxu0 0
        %614 = vmatprep.subr.bf16.mxu0 0
        %615 = vmatpush1.bf16.msra.mxu0 0
        %616 = vmatprep.subr.bf16.mxu0 0
        %617 = vmatpush1.bf16.msra.mxu0 0
        %618 = vmatprep.subr.bf16.mxu0 0
        %619 = vmatpush1.bf16.msra.mxu0 0
        %620 = vmatprep.subr.bf16.mxu0 0
        %621 = vmatpush1.bf16.msra.mxu0 0
        %622 = vmatprep.subr.bf16.mxu0 0
        %623 = vmatpush1.bf16.msra.mxu0 0
        %624 = vmatprep.subr.bf16.mxu0 0
        %625 = vmatpush1.bf16.msra.mxu0 0
        %626 = vmatprep.subr.bf16.mxu0 0
        %627 = vmatpush1.bf16.msra.mxu0 0
        %628 = vmatprep.subr.bf16.mxu0 0
        %629 = vmatpush1.bf16.msra.mxu0 0
        %630 = vmatprep.subr.bf16.mxu0 0
        %631 = vmatpush1.bf16.msra.mxu0 0
        %632 = vmatprep.subr.bf16.mxu0 0
        %633 = vmatpush1.bf16.msra.mxu0 0
        %634 = vmatprep.subr.bf16.mxu0 0
        %635 = vmatpush1.bf16.msra.mxu0 0
        %636 = vmatprep.subr.bf16.mxu0 0
        %637 = vmatpush1.bf16.msra.mxu0 0
        %638 = vmatprep.subr.bf16.mxu0 0
        %639 = vmatpush1.bf16.msra.mxu0 0
        %640 = vmatprep.mubr.bf16.mxu0 0
        %641 = vmatmul.mubr.bf16.gmra.mrb[0].mxu0 %v606
        %v642 = vpop.f32.mrb[0].mxu0
        %v643 = vadd.f32 %v591, %v642
        %v644 = vpop.f32.mrb[0].mxu0
        %v645 = vpop.f32.mrb[0].mxu0
        %v646 = vpop.f32.mrb[0].mxu0
        %647 = vdwg.mxu0
        %v648 = vpack.c.bf16 %v643, %v643
        %v649 = vld [vmem:[%s6] sm:$0xf]
        %v650 = vld [vmem:[%s6 + $0x4] sm:$0xf]
        %v651 = vld [vmem:[%s6 + $0x8] sm:$0xf]
        %v652 = vld [vmem:[%s6 + $0xc] sm:$0xf]
        %v653 = vld [vmem:[%s7] sm:$0x1]
        %v655 = vlaneseq
        %v656 = vshrl.u32 %v655, 7
        %v657 = vsub.s32 0, %v656
        %v658 = vrot.slane %v653, %v657
        %v664 = vunpack.c.l.b16 %v649
        %v665 = vunpack.c.l.b16 %v650
        %v666 = vunpack.c.l.b16 %v651
        %v667 = vunpack.c.l.b16 %v652
        %v668 = vpack.c.b16 %v665, %v664
        %v669 = vpack.c.b16 %v667, %v666
        %672 = vmatprep.subr.bf16.mxu0 0
        %673 = vmatpush1.bf16.msra.mxu0 %v668
        %674 = vmatprep.subr.bf16.mxu0 0
        %675 = vmatpush1.bf16.msra.mxu0 %v669
        %676 = vmatprep.subr.bf16.mxu0 0
        %677 = vmatpush1.bf16.msra.mxu0 0
        %678 = vmatprep.subr.bf16.mxu0 0
        %679 = vmatpush1.bf16.msra.mxu0 0
        %680 = vmatprep.subr.bf16.mxu0 0
        %681 = vmatpush1.bf16.msra.mxu0 0
        %682 = vmatprep.subr.bf16.mxu0 0
        %683 = vmatpush1.bf16.msra.mxu0 0
        %684 = vmatprep.subr.bf16.mxu0 0
        %685 = vmatpush1.bf16.msra.mxu0 0
        %686 = vmatprep.subr.bf16.mxu0 0
        %687 = vmatpush1.bf16.msra.mxu0 0
        %688 = vmatprep.subr.bf16.mxu0 0
        %689 = vmatpush1.bf16.msra.mxu0 0
        %690 = vmatprep.subr.bf16.mxu0 0
        %691 = vmatpush1.bf16.msra.mxu0 0
        %692 = vmatprep.subr.bf16.mxu0 0
        %693 = vmatpush1.bf16.msra.mxu0 0
        %694 = vmatprep.subr.bf16.mxu0 0
        %695 = vmatpush1.bf16.msra.mxu0 0
        %696 = vmatprep.subr.bf16.mxu0 0
        %697 = vmatpush1.bf16.msra.mxu0 0
        %698 = vmatprep.subr.bf16.mxu0 0
        %699 = vmatpush1.bf16.msra.mxu0 0
        %700 = vmatprep.subr.bf16.mxu0 0
        %701 = vmatpush1.bf16.msra.mxu0 0
        %702 = vmatprep.subr.bf16.mxu0 0
        %703 = vmatpush1.bf16.msra.mxu0 0
        %704 = vmatprep.mubr.bf16.mxu0 0
        %705 = vmatmul.mubr.bf16.gmra.mrb[0].mxu0 %v606
        %v706 = vpop.f32.mrb[0].mxu0
        %v707 = vadd.f32 %v658, %v706
        %v708 = vpop.f32.mrb[0].mxu0
        %v709 = vpop.f32.mrb[0].mxu0
        %v710 = vpop.f32.mrb[0].mxu0
        %711 = vdwg.mxu0
        %v712 = vpack.c.bf16 %v707, %v707
        %vm713 = vcmask 64512
        %v715 = vsel %vm713, %v581, 0
        %v718 = vsel %vm713, %v648, 0
        %720 = vmatprep.subr.bf16.mxu0 0
        %721 = vmatpush1.bf16.xpose.msra.mxu0 %v718
        %722 = vmatprep.subr.bf16.mxu0 0
        %723 = vmatpush1.bf16.xpose.msra.mxu0 0
        %724 = vmatprep.subr.bf16.mxu0 0
        %725 = vmatpush1.bf16.xpose.msra.mxu0 0
        %726 = vmatprep.subr.bf16.mxu0 0
        %727 = vmatpush1.bf16.xpose.msra.mxu0 0
        %728 = vmatprep.subr.bf16.mxu0 0
        %729 = vmatpush1.bf16.xpose.msra.mxu0 0
        %730 = vmatprep.subr.bf16.mxu0 0
        %731 = vmatpush1.bf16.xpose.msra.mxu0 0
        %732 = vmatprep.subr.bf16.mxu0 0
        %733 = vmatpush1.bf16.xpose.msra.mxu0 0
        %734 = vmatprep.subr.bf16.mxu0 0
        %735 = vmatpush1.bf16.xpose.msra.mxu0 0
        %736 = vmatprep.subr.bf16.mxu0 0
        %737 = vmatpush1.bf16.xpose.msra.mxu0 0
        %738 = vmatprep.subr.bf16.mxu0 0
        %739 = vmatpush1.bf16.xpose.msra.mxu0 0
        %740 = vmatprep.subr.bf16.mxu0 0
        %741 = vmatpush1.bf16.xpose.msra.mxu0 0
        %742 = vmatprep.subr.bf16.mxu0 0
        %743 = vmatpush1.bf16.xpose.msra.mxu0 0
        %744 = vmatprep.subr.bf16.mxu0 0
        %745 = vmatpush1.bf16.xpose.msra.mxu0 0
        %746 = vmatprep.subr.bf16.mxu0 0
        %747 = vmatpush1.bf16.xpose.msra.mxu0 0
        %748 = vmatprep.subr.bf16.mxu0 0
        %749 = vmatpush1.bf16.xpose.msra.mxu0 0
        %750 = vmatprep.subr.bf16.mxu0 0
        %751 = vmatpush1.bf16.xpose.msra.mxu0 0
        %752 = vmatprep.mubr.bf16.mxu0 0
        %753 = vmatmul.mubr.bf16.gmra.mrb[0].mxu0 %v715
        %v754 = vpop.f32.mrb[0].mxu0
        %v755 = vadd.f32 0.0, %v754
        %v756 = vpop.f32.mrb[0].mxu0
        %v757 = vpop.f32.mrb[0].mxu0
        %v758 = vpop.f32.mrb[0].mxu0
        %759 = vdwg.mxu0
        %v760 = vmul.f32 %v755, 0.35355338
        %v761 = vsel %vm713, %v760, -inf
        %762 = vmax.xlane.f32.xlu0 %v761
        %v763 = vpop.xlane.xlu0 %762
        %v764 = vsub.f32 %v760, %v763
        %v765 = vmul.f32 %v764, 1.442695
        %v766 = vpow.pop %v765
        %v767 = vsel %vm713, %v766, 0.0
        %768 = vadd.xlane.f32.xlu0 %v767
        %v769 = vpop.xlane.xlu0 %768
        %v770 = vrcp.pop %v769
        %v771 = vmul.f32 %v766, %v770
        %v772 = vpack.c.bf16 %v771, %v771
        %v774 = vsel %vm713, %v772, 0
        %vm776 = vcmask 1043456
        %v778 = vsel %vm776, %v712, 0
        %780 = vmatprep.subr.bf16.mxu0 0
        %781 = vmatpush1.bf16.msra.mxu0 %v778
        %782 = vmatprep.subr.bf16.mxu0 0
        %783 = vmatpush1.bf16.msra.mxu0 0
        %784 = vmatprep.subr.bf16.mxu0 0
        %785 = vmatpush1.bf16.msra.mxu0 0
        %786 = vmatprep.subr.bf16.mxu0 0
        %787 = vmatpush1.bf16.msra.mxu0 0
        %788 = vmatprep.subr.bf16.mxu0 0
        %789 = vmatpush1.bf16.msra.mxu0 0
        %790 = vmatprep.subr.bf16.mxu0 0
        %791 = vmatpush1.bf16.msra.mxu0 0
        %792 = vmatprep.subr.bf16.mxu0 0
        %793 = vmatpush1.bf16.msra.mxu0 0
        %794 = vmatprep.subr.bf16.mxu0 0
        %795 = vmatpush1.bf16.msra.mxu0 0
        %796 = vmatprep.subr.bf16.mxu0 0
        %797 = vmatpush1.bf16.msra.mxu0 0
        %798 = vmatprep.subr.bf16.mxu0 0
        %799 = vmatpush1.bf16.msra.mxu0 0
        %800 = vmatprep.subr.bf16.mxu0 0
        %801 = vmatpush1.bf16.msra.mxu0 0
        %802 = vmatprep.subr.bf16.mxu0 0
        %803 = vmatpush1.bf16.msra.mxu0 0
        %804 = vmatprep.subr.bf16.mxu0 0
        %805 = vmatpush1.bf16.msra.mxu0 0
        %806 = vmatprep.subr.bf16.mxu0 0
        %807 = vmatpush1.bf16.msra.mxu0 0
        %808 = vmatprep.subr.bf16.mxu0 0
        %809 = vmatpush1.bf16.msra.mxu0 0
        %810 = vmatprep.subr.bf16.mxu0 0
        %811 = vmatpush1.bf16.msra.mxu0 0
        %812 = vmatprep.mubr.bf16.mxu0 0
        %813 = vmatmul.mubr.bf16.gmra.mrb[0].mxu0 %v774
        %v814 = vpop.f32.mrb[0].mxu0
        %v815 = vadd.f32 0.0, %v814
        %v816 = vpop.f32.mrb[0].mxu0
        %v817 = vpop.f32.mrb[0].mxu0
        %v818 = vpop.f32.mrb[0].mxu0
        %819 = vdwg.mxu0
        %820 = vst.msk [vmem:[#allocation2] sm:$0xff] %vm713, %v815
        %822 = vrot.lane.b32.xlu0 %v581, 120
        %v823 = vpop.permute.xlu0 %822
        %825 = vrot.lane.b32.xlu0 %v648, 120
        %v826 = vpop.permute.xlu0 %825
        %v828 = vsel %vm713, %v823, 0
        %v831 = vsel %vm713, %v826, 0
        %833 = vmatprep.subr.bf16.mxu0 0
        %834 = vmatpush1.bf16.xpose.msra.mxu0 %v831
        %835 = vmatprep.subr.bf16.mxu0 0
        %836 = vmatpush1.bf16.xpose.msra.mxu0 0
        %837 = vmatprep.subr.bf16.mxu0 0
        %838 = vmatpush1.bf16.xpose.msra.mxu0 0
        %839 = vmatprep.subr.bf16.mxu0 0
        %840 = vmatpush1.bf16.xpose.msra.mxu0 0
        %841 = vmatprep.subr.bf16.mxu0 0
        %842 = vmatpush1.bf16.xpose.msra.mxu0 0
        %843 = vmatprep.subr.bf16.mxu0 0
        %844 = vmatpush1.bf16.xpose.msra.mxu0 0
        %845 = vmatprep.subr.bf16.mxu0 0
        %846 = vmatpush1.bf16.xpose.msra.mxu0 0
        %847 = vmatprep.subr.bf16.mxu0 0
        %848 = vmatpush1.bf16.xpose.msra.mxu0 0
        %849 = vmatprep.subr.bf16.mxu0 0
        %850 = vmatpush1.bf16.xpose.msra.mxu0 0
        %851 = vmatprep.subr.bf16.mxu0 0
        %852 = vmatpush1.bf16.xpose.msra.mxu0 0
        %853 = vmatprep.subr.bf16.mxu0 0
        %854 = vmatpush1.bf16.xpose.msra.mxu0 0
        %855 = vmatprep.subr.bf16.mxu0 0
        %856 = vmatpush1.bf16.xpose.msra.mxu0 0
        %857 = vmatprep.subr.bf16.mxu0 0
        %858 = vmatpush1.bf16.xpose.msra.mxu0 0
        %859 = vmatprep.subr.bf16.mxu0 0
        %860 = vmatpush1.bf16.xpose.msra.mxu0 0
        %861 = vmatprep.subr.bf16.mxu0 0
        %862 = vmatpush1.bf16.xpose.msra.mxu0 0
        %863 = vmatprep.subr.bf16.mxu0 0
        %864 = vmatpush1.bf16.xpose.msra.mxu0 0
        %865 = vmatprep.mubr.bf16.mxu0 0
        %866 = vmatmul.mubr.bf16.gmra.mrb[0].mxu0 %v828
        %v867 = vpop.f32.mrb[0].mxu0
        %v868 = vadd.f32 0.0, %v867
        %v869 = vpop.f32.mrb[0].mxu0
        %v870 = vpop.f32.mrb[0].mxu0
        %v871 = vpop.f32.mrb[0].mxu0
        %872 = vdwg.mxu0
        %v873 = vmul.f32 %v868, 0.35355338
        %v874 = vsel %vm713, %v873, -inf
        %875 = vmax.xlane.f32.xlu0 %v874
        %v876 = vpop.xlane.xlu0 %875
        %v877 = vsub.f32 %v873, %v876
        %v878 = vmul.f32 %v877, 1.442695
        %v879 = vpow.pop %v878
        %v880 = vsel %vm713, %v879, 0.0
        %881 = vadd.xlane.f32.xlu0 %v880
        %v882 = vpop.xlane.xlu0 %881
        %v883 = vrcp.pop %v882
        %v884 = vmul.f32 %v879, %v883
        %v885 = vpack.c.bf16 %v884, %v884
        %887 = vrot.lane.b32.xlu0 %v712, 120
        %v888 = vpop.permute.xlu0 %887
        %v890 = vsel %vm713, %v885, 0
        %v893 = vsel %vm776, %v888, 0
        %895 = vmatprep.subr.bf16.mxu0 0
        %896 = vmatpush1.bf16.msra.mxu0 %v893
        %897 = vmatprep.subr.bf16.mxu0 0
        %898 = vmatpush1.bf16.msra.mxu0 0
        %899 = vmatprep.subr.bf16.mxu0 0
        %900 = vmatpush1.bf16.msra.mxu0 0
        %901 = vmatprep.subr.bf16.mxu0 0
        %902 = vmatpush1.bf16.msra.mxu0 0
        %903 = vmatprep.subr.bf16.mxu0 0
        %904 = vmatpush1.bf16.msra.mxu0 0
        %905 = vmatprep.subr.bf16.mxu0 0
        %906 = vmatpush1.bf16.msra.mxu0 0
        %907 = vmatprep.subr.bf16.mxu0 0
        %908 = vmatpush1.bf16.msra.mxu0 0
        %909 = vmatprep.subr.bf16.mxu0 0
        %910 = vmatpush1.bf16.msra.mxu0 0
        %911 = vmatprep.subr.bf16.mxu0 0
        %912 = vmatpush1.bf16.msra.mxu0 0
        %913 = vmatprep.subr.bf16.mxu0 0
        %914 = vmatpush1.bf16.msra.mxu0 0
        %915 = vmatprep.subr.bf16.mxu0 0
        %916 = vmatpush1.bf16.msra.mxu0 0
        %917 = vmatprep.subr.bf16.mxu0 0
        %918 = vmatpush1.bf16.msra.mxu0 0
        %919 = vmatprep.subr.bf16.mxu0 0
        %920 = vmatpush1.bf16.msra.mxu0 0
        %921 = vmatprep.subr.bf16.mxu0 0
        %922 = vmatpush1.bf16.msra.mxu0 0
        %923 = vmatprep.subr.bf16.mxu0 0
        %924 = vmatpush1.bf16.msra.mxu0 0
        %925 = vmatprep.subr.bf16.mxu0 0
        %926 = vmatpush1.bf16.msra.mxu0 0
        %927 = vmatprep.mubr.bf16.mxu0 0
        %928 = vmatmul.mubr.bf16.gmra.mrb[0].mxu0 %v890
        %v929 = vpop.f32.mrb[0].mxu0
        %v930 = vadd.f32 0.0, %v929
        %v931 = vpop.f32.mrb[0].mxu0
        %v932 = vpop.f32.mrb[0].mxu0
        %v933 = vpop.f32.mrb[0].mxu0
        %934 = vdwg.mxu0
        %936 = vrot.lane.b32.xlu0 %v930, 8
        %v937 = vpop.permute.xlu0 %936
        %vm939 = vcmask 130112
        %940 = vst.msk [vmem:[#allocation2] sm:$0xff] %vm939, %v937
        %941 = vrot.lane.b32.xlu0 %v581, 112
        %v942 = vpop.permute.xlu0 %941
        %943 = vrot.lane.b32.xlu0 %v648, 112
        %v944 = vpop.permute.xlu0 %943
        %v946 = vsel %vm713, %v942, 0
        %v949 = vsel %vm713, %v944, 0
        %951 = vmatprep.subr.bf16.mxu0 0
        %952 = vmatpush1.bf16.xpose.msra.mxu0 %v949
        %953 = vmatprep.subr.bf16.mxu0 0
        %954 = vmatpush1.bf16.xpose.msra.mxu0 0
        %955 = vmatprep.subr.bf16.mxu0 0
        %956 = vmatpush1.bf16.xpose.msra.mxu0 0
        %957 = vmatprep.subr.bf16.mxu0 0
        %958 = vmatpush1.bf16.xpose.msra.mxu0 0
        %959 = vmatprep.subr.bf16.mxu0 0
        %960 = vmatpush1.bf16.xpose.msra.mxu0 0
        %961 = vmatprep.subr.bf16.mxu0 0
        %962 = vmatpush1.bf16.xpose.msra.mxu0 0
        %963 = vmatprep.subr.bf16.mxu0 0
        %964 = vmatpush1.bf16.xpose.msra.mxu0 0
        %965 = vmatprep.subr.bf16.mxu0 0
        %966 = vmatpush1.bf16.xpose.msra.mxu0 0
        %967 = vmatprep.subr.bf16.mxu0 0
        %968 = vmatpush1.bf16.xpose.msra.mxu0 0
        %969 = vmatprep.subr.bf16.mxu0 0
        %970 = vmatpush1.bf16.xpose.msra.mxu0 0
        %971 = vmatprep.subr.bf16.mxu0 0
        %972 = vmatpush1.bf16.xpose.msra.mxu0 0
        %973 = vmatprep.subr.bf16.mxu0 0
        %974 = vmatpush1.bf16.xpose.msra.mxu0 0
        %975 = vmatprep.subr.bf16.mxu0 0
        %976 = vmatpush1.bf16.xpose.msra.mxu0 0
        %977 = vmatprep.subr.bf16.mxu0 0
        %978 = vmatpush1.bf16.xpose.msra.mxu0 0
        %979 = vmatprep.subr.bf16.mxu0 0
        %980 = vmatpush1.bf16.xpose.msra.mxu0 0
        %981 = vmatprep.subr.bf16.mxu0 0
        %982 = vmatpush1.bf16.xpose.msra.mxu0 0
        %983 = vmatprep.mubr.bf16.mxu0 0
        %984 = vmatmul.mubr.bf16.gmra.mrb[0].mxu0 %v946
        %v985 = vpop.f32.mrb[0].mxu0
        %v986 = vadd.f32 0.0, %v985
        %v987 = vpop.f32.mrb[0].mxu0
        %v988 = vpop.f32.mrb[0].mxu0
        %v989 = vpop.f32.mrb[0].mxu0
        %990 = vdwg.mxu0
        %v991 = vmul.f32 %v986, 0.35355338
        %v992 = vsel %vm713, %v991, -inf
        %993 = vmax.xlane.f32.xlu0 %v992
        %v994 = vpop.xlane.xlu0 %993
        %v995 = vsub.f32 %v991, %v994
        %v996 = vmul.f32 %v995, 1.442695
        %v997 = vpow.pop %v996
        %v998 = vsel %vm713, %v997, 0.0
        %999 = vadd.xlane.f32.xlu0 %v998
        %v1000 = vpop.xlane.xlu0 %999
        %v1001 = vrcp.pop %v1000
        %v1002 = vmul.f32 %v997, %v1001
        %v1003 = vpack.c.bf16 %v1002, %v1002
        %1004 = vrot.lane.b32.xlu0 %v712, 112
        %v1005 = vpop.permute.xlu0 %1004
        %v1007 = vsel %vm713, %v1003, 0
        %v1010 = vsel %vm776, %v1005, 0
        %1012 = vmatprep.subr.bf16.mxu0 0
        %1013 = vmatpush1.bf16.msra.mxu0 %v1010
        %1014 = vmatprep.subr.bf16.mxu0 0
        %1015 = vmatpush1.bf16.msra.mxu0 0
        %1016 = vmatprep.subr.bf16.mxu0 0
        %1017 = vmatpush1.bf16.msra.mxu0 0
        %1018 = vmatprep.subr.bf16.mxu0 0
        %1019 = vmatpush1.bf16.msra.mxu0 0
        %1020 = vmatprep.subr.bf16.mxu0 0
        %1021 = vmatpush1.bf16.msra.mxu0 0
        %1022 = vmatprep.subr.bf16.mxu0 0
        %1023 = vmatpush1.bf16.msra.mxu0 0
        %1024 = vmatprep.subr.bf16.mxu0 0
        %1025 = vmatpush1.bf16.msra.mxu0 0
        %1026 = vmatprep.subr.bf16.mxu0 0
        %1027 = vmatpush1.bf16.msra.mxu0 0
        %1028 = vmatprep.subr.bf16.mxu0 0
        %1029 = vmatpush1.bf16.msra.mxu0 0
        %1030 = vmatprep.subr.bf16.mxu0 0
        %1031 = vmatpush1.bf16.msra.mxu0 0
        %1032 = vmatprep.subr.bf16.mxu0 0
        %1033 = vmatpush1.bf16.msra.mxu0 0
        %1034 = vmatprep.subr.bf16.mxu0 0
        %1035 = vmatpush1.bf16.msra.mxu0 0
        %1036 = vmatprep.subr.bf16.mxu0 0
        %1037 = vmatpush1.bf16.msra.mxu0 0
        %1038 = vmatprep.subr.bf16.mxu0 0
        %1039 = vmatpush1.bf16.msra.mxu0 0
        %1040 = vmatprep.subr.bf16.mxu0 0
        %1041 = vmatpush1.bf16.msra.mxu0 0
        %1042 = vmatprep.subr.bf16.mxu0 0
        %1043 = vmatpush1.bf16.msra.mxu0 0
        %1044 = vmatprep.mubr.bf16.mxu0 0
        %1045 = vmatmul.mubr.bf16.gmra.mrb[0].mxu0 %v1007
        %v1046 = vpop.f32.mrb[0].mxu0
        %v1047 = vadd.f32 0.0, %v1046
        %v1048 = vpop.f32.mrb[0].mxu0
        %v1049 = vpop.f32.mrb[0].mxu0
        %v1050 = vpop.f32.mrb[0].mxu0
        %1051 = vdwg.mxu0
        %1053 = vrot.lane.b32.xlu0 %v1047, 16
        %v1054 = vpop.permute.xlu0 %1053
        %vm1056 = vcmask 195712
        %1057 = vst.msk [vmem:[#allocation2] sm:$0xff] %vm1056, %v1054
        %1058 = vrot.lane.b32.xlu0 %v581, 104
        %v1059 = vpop.permute.xlu0 %1058
        %1060 = vrot.lane.b32.xlu0 %v648, 104
        %v1061 = vpop.permute.xlu0 %1060
        %v1063 = vsel %vm713, %v1059, 0
        %v1066 = vsel %vm713, %v1061, 0
        %1068 = vmatprep.subr.bf16.mxu0 0
        %1069 = vmatpush1.bf16.xpose.msra.mxu0 %v1066
        %1070 = vmatprep.subr.bf16.mxu0 0
        %1071 = vmatpush1.bf16.xpose.msra.mxu0 0
        %1072 = vmatprep.subr.bf16.mxu0 0
        %1073 = vmatpush1.bf16.xpose.msra.mxu0 0
        %1074 = vmatprep.subr.bf16.mxu0 0
        %1075 = vmatpush1.bf16.xpose.msra.mxu0 0
        %1076 = vmatprep.subr.bf16.mxu0 0
        %1077 = vmatpush1.bf16.xpose.msra.mxu0 0
        %1078 = vmatprep.subr.bf16.mxu0 0
        %1079 = vmatpush1.bf16.xpose.msra.mxu0 0
        %1080 = vmatprep.subr.bf16.mxu0 0
        %1081 = vmatpush1.bf16.xpose.msra.mxu0 0
        %1082 = vmatprep.subr.bf16.mxu0 0
        %1083 = vmatpush1.bf16.xpose.msra.mxu0 0
        %1084 = vmatprep.subr.bf16.mxu0 0
        %1085 = vmatpush1.bf16.xpose.msra.mxu0 0
        %1086 = vmatprep.subr.bf16.mxu0 0
        %1087 = vmatpush1.bf16.xpose.msra.mxu0 0
        %1088 = vmatprep.subr.bf16.mxu0 0
        %1089 = vmatpush1.bf16.xpose.msra.mxu0 0
        %1090 = vmatprep.subr.bf16.mxu0 0
        %1091 = vmatpush1.bf16.xpose.msra.mxu0 0
        %1092 = vmatprep.subr.bf16.mxu0 0
        %1093 = vmatpush1.bf16.xpose.msra.mxu0 0
        %1094 = vmatprep.subr.bf16.mxu0 0
        %1095 = vmatpush1.bf16.xpose.msra.mxu0 0
        %1096 = vmatprep.subr.bf16.mxu0 0
        %1097 = vmatpush1.bf16.xpose.msra.mxu0 0
        %1098 = vmatprep.subr.bf16.mxu0 0
        %1099 = vmatpush1.bf16.xpose.msra.mxu0 0
        %1100 = vmatprep.mubr.bf16.mxu0 0
        %1101 = vmatmul.mubr.bf16.gmra.mrb[0].mxu0 %v1063
        %v1102 = vpop.f32.mrb[0].mxu0
        %v1103 = vadd.f32 0.0, %v1102
        %v1104 = vpop.f32.mrb[0].mxu0
        %v1105 = vpop.f32.mrb[0].mxu0
        %v1106 = vpop.f32.mrb[0].mxu0
        %1107 = vdwg.mxu0
        %v1108 = vmul.f32 %v1103, 0.35355338
        %v1109 = vsel %vm713, %v1108, -inf
        %1110 = vmax.xlane.f32.xlu0 %v1109
        %v1111 = vpop.xlane.xlu0 %1110
        %v1112 = vsub.f32 %v1108, %v1111
        %v1113 = vmul.f32 %v1112, 1.442695
        %v1114 = vpow.pop %v1113
        %v1115 = vsel %vm713, %v1114, 0.0
        %1116 = vadd.xlane.f32.xlu0 %v1115
        %v1117 = vpop.xlane.xlu0 %1116
        %v1118 = vrcp.pop %v1117
        %v1119 = vmul.f32 %v1114, %v1118
        %v1120 = vpack.c.bf16 %v1119, %v1119
        %1121 = vrot.lane.b32.xlu0 %v712, 104
        %v1122 = vpop.permute.xlu0 %1121
        %v1124 = vsel %vm713, %v1120, 0
        %v1127 = vsel %vm776, %v1122, 0
        %1129 = vmatprep.subr.bf16.mxu0 0
        %1130 = vmatpush1.bf16.msra.mxu0 %v1127
        %1131 = vmatprep.subr.bf16.mxu0 0
        %1132 = vmatpush1.bf16.msra.mxu0 0
        %1133 = vmatprep.subr.bf16.mxu0 0
        %1134 = vmatpush1.bf16.msra.mxu0 0
        %1135 = vmatprep.subr.bf16.mxu0 0
        %1136 = vmatpush1.bf16.msra.mxu0 0
        %1137 = vmatprep.subr.bf16.mxu0 0
        %1138 = vmatpush1.bf16.msra.mxu0 0
        %1139 = vmatprep.subr.bf16.mxu0 0
        %1140 = vmatpush1.bf16.msra.mxu0 0
        %1141 = vmatprep.subr.bf16.mxu0 0
        %1142 = vmatpush1.bf16.msra.mxu0 0
        %1143 = vmatprep.subr.bf16.mxu0 0
        %1144 = vmatpush1.bf16.msra.mxu0 0
        %1145 = vmatprep.subr.bf16.mxu0 0
        %1146 = vmatpush1.bf16.msra.mxu0 0
        %1147 = vmatprep.subr.bf16.mxu0 0
        %1148 = vmatpush1.bf16.msra.mxu0 0
        %1149 = vmatprep.subr.bf16.mxu0 0
        %1150 = vmatpush1.bf16.msra.mxu0 0
        %1151 = vmatprep.subr.bf16.mxu0 0
        %1152 = vmatpush1.bf16.msra.mxu0 0
        %1153 = vmatprep.subr.bf16.mxu0 0
        %1154 = vmatpush1.bf16.msra.mxu0 0
        %1155 = vmatprep.subr.bf16.mxu0 0
        %1156 = vmatpush1.bf16.msra.mxu0 0
        %1157 = vmatprep.subr.bf16.mxu0 0
        %1158 = vmatpush1.bf16.msra.mxu0 0
        %1159 = vmatprep.subr.bf16.mxu0 0
        %1160 = vmatpush1.bf16.msra.mxu0 0
        %1161 = vmatprep.mubr.bf16.mxu0 0
        %1162 = vmatmul.mubr.bf16.gmra.mrb[0].mxu0 %v1124
        %v1163 = vpop.f32.mrb[0].mxu0
        %v1164 = vadd.f32 0.0, %v1163
        %v1165 = vpop.f32.mrb[0].mxu0
        %v1166 = vpop.f32.mrb[0].mxu0
        %v1167 = vpop.f32.mrb[0].mxu0
        %1168 = vdwg.mxu0
        %1170 = vrot.lane.b32.xlu0 %v1164, 24
        %v1171 = vpop.permute.xlu0 %1170
        %vm1173 = vcmask 261312
        %1174 = vst.msk [vmem:[#allocation2] sm:$0xff] %vm1173, %v1171
        %v1175 = vld [vmem:[#allocation2] sm:$0xff]
        %v1176 = vpack.c.bf16 %v1175, %v1175
        %v1177 = vld [vmem:[#allocation11] sm:$0xf]
        %v1178 = vld [vmem:[#allocation11 + $0x4] sm:$0xf]
        %v1179 = vld [vmem:[#allocation11 + $0x8] sm:$0xf]
        %v1180 = vld [vmem:[#allocation11 + $0xc] sm:$0xf]
        %v1181 = vld [vmem:[%s9] sm:$0x1]
        %v1183 = vlaneseq
        %v1184 = vshrl.u32 %v1183, 7
        %v1185 = vsub.s32 0, %v1184
        %v1186 = vrot.slane %v1181, %v1185
        %v1192 = vunpack.c.l.b16 %v1177
        %v1193 = vunpack.c.l.b16 %v1178
        %v1194 = vunpack.c.l.b16 %v1179
        %v1195 = vunpack.c.l.b16 %v1180
        %v1196 = vpack.c.b16 %v1193, %v1192
        %v1197 = vpack.c.b16 %v1195, %v1194
        %v1201 = vsel %vm537, %v1176, 0
        %1203 = vmatprep.subr.bf16.mxu0 0
        %1204 = vmatpush1.bf16.msra.mxu0 %v1196
        %1205 = vmatprep.subr.bf16.mxu0 0
        %1206 = vmatpush1.bf16.msra.mxu0 %v1197
        %1207 = vmatprep.subr.bf16.mxu0 0
        %1208 = vmatpush1.bf16.msra.mxu0 0
        %1209 = vmatprep.subr.bf16.mxu0 0
        %1210 = vmatpush1.bf16.msra.mxu0 0
        %1211 = vmatprep.subr.bf16.mxu0 0
        %1212 = vmatpush1.bf16.msra.mxu0 0
        %1213 = vmatprep.subr.bf16.mxu0 0
        %1214 = vmatpush1.bf16.msra.mxu0 0
        %1215 = vmatprep.subr.bf16.mxu0 0
        %1216 = vmatpush1.bf16.msra.mxu0 0
        %1217 = vmatprep.subr.bf16.mxu0 0
        %1218 = vmatpush1.bf16.msra.mxu0 0
        %1219 = vmatprep.subr.bf16.mxu0 0
        %1220 = vmatpush1.bf16.msra.mxu0 0
        %1221 = vmatprep.subr.bf16.mxu0 0
        %1222 = vmatpush1.bf16.msra.mxu0 0
        %1223 = vmatprep.subr.bf16.mxu0 0
        %1224 = vmatpush1.bf16.msra.mxu0 0
        %1225 = vmatprep.subr.bf16.mxu0 0
        %1226 = vmatpush1.bf16.msra.mxu0 0
        %1227 = vmatprep.subr.bf16.mxu0 0
        %1228 = vmatpush1.bf16.msra.mxu0 0
        %1229 = vmatprep.subr.bf16.mxu0 0
        %1230 = vmatpush1.bf16.msra.mxu0 0
        %1231 = vmatprep.subr.bf16.mxu0 0
        %1232 = vmatpush1.bf16.msra.mxu0 0
        %1233 = vmatprep.subr.bf16.mxu0 0
        %1234 = vmatpush1.bf16.msra.mxu0 0
        %1235 = vmatprep.mubr.bf16.mxu0 0
        %1236 = vmatmul.mubr.bf16.gmra.mrb[0].mxu0 %v1201
        %v1237 = vpop.f32.mrb[0].mxu0
        %v1238 = vadd.f32 %v1186, %v1237
        %v1239 = vpop.f32.mrb[0].mxu0
        %v1240 = vpop.f32.mrb[0].mxu0
        %v1241 = vpop.f32.mrb[0].mxu0
        %1242 = vdwg.mxu0
        %v1243 = vadd.f32 %v510, %v1238
        %v1244 = vsel %vm537, %v1243, 0.0
        %1245 = vadd.xlane.f32.xlu0 %v1244
        %v1246 = vpop.xlane.xlu0 %1245
        %v1247 = vrcp.pop 32.0
        %v1248 = vmul.f32 %v1246, %v1247
        %v1249 = vsub.f32 %v1243, %v1248
        %v1250 = vmul.f32 %v1249, %v1249
        %v1251 = vsel %vm537, %v1250, 0.0
        %1252 = vadd.xlane.f32.xlu0 %v1251
        %v1253 = vpop.xlane.xlu0 %1252
        %v1254 = vmul.f32 %v1253, %v1247
        %v1255 = vadd.f32 %v1254, 1e-05
        %v1256 = vrsqrt.pop %v1255
        %v1257 = vmul.f32 %v1249, %v1256
        %v1258 = vld [vmem:[%s10] sm:$0x1]
        %v1260 = vlaneseq
        %v1261 = vshrl.u32 %v1260, 7
        %v1262 = vsub.s32 0, %v1261
        %v1263 = vrot.slane %v1258, %v1262
        %v1265 = vmul.f32 %v1257, %v1263
        %v1266 = vld [vmem:[%s11] sm:$0x1]
        %v1268 = vlaneseq
        %v1269 = vshrl.u32 %v1268, 7
        %v1270 = vsub.s32 0, %v1269
        %v1271 = vrot.slane %v1266, %v1270
        %v1273 = vadd.f32 %v1265, %v1271
        %1274 = vst.msk [vmem:[%s508] sm:$0xff] %vm537, %v1273
        %s1275 = sand.u32 %s303, 1
        %s1276 = scalar_lea.sflag [#allocation5], %s1275
        %s1277 = sand.u32 %s303, 1
        %s1278 = smul.addr %s1277, 8
        %s1279 = scalar_lea.vmem [#allocation12], %s1278
        // Predicated region
        $region89: #{tpu_custom_call.1} parent=67 // pred_check
          %p1280 = pneg %p313
        $region90: #{tpu_custom_call.1} parent=67 // pred_check_branch
          %1282 = sbr.rel (%p1280) target = $region92
        $region91: #{tpu_custom_call.1} parent=67 // pred_region
          %s1284 = ssub.s32 128, 128
          %1285 = vsyncadd %s1276, %s1284
          %s1286 = smul.addr %s33, 128
          %s1287 = scalar_lea.hbm %s12, %s1286
          %s1289 = sshll.u32 %s1279, 4
          %s1290 = int_to_ptr.vmem [resolvable:$true] %s1289
          %1292 = dma.vmem_to_hbm [thread:$0]  %s1290, 128, %s1287, %s1276
        $region92: #{tpu_custom_call.1} parent=67 // pred_fallthru
          _
      $region68: #{tpu_custom_call.1} parent=5 // pred_fallthru
        _
      %p1293 = scmp.le.s32.totalorder 2, %s28
      // Predicated region
      $region93: #{tpu_custom_call.1} parent=5 // pred_check
        %p1294 = pneg %p1293
      $region94: #{tpu_custom_call.1} parent=5 // pred_check_branch
        %1296 = sbr.rel (%p1294) target = $region96
      $region95: #{tpu_custom_call.1} parent=5 // pred_region
        %s1297 = ssub.s32 %s28, 2
        // Predicated region
        $region97: #{tpu_custom_call.1} parent=95 // pred_check
          %p1298 = pneg %p319
        $region98: #{tpu_custom_call.1} parent=95 // pred_check_branch
          %1300 = sbr.rel (%p1298) target = $region100
        $region99: #{tpu_custom_call.1} parent=95 // pred_region
          %s1301 = sand.u32 %s304, 1
          %s1302 = scalar_lea.sflag [#allocation5], %s1301
          %s1303 = sand.u32 %s304, 1
          %s1304 = smul.addr %s1303, 8
          %s1305 = scalar_lea.vmem [#allocation12], %s1304
          %1306 = dma.done %s1302, 128
        $region100: #{tpu_custom_call.1} parent=95 // pred_fallthru
          _
      $region96: #{tpu_custom_call.1} parent=5 // pred_fallthru
        _
    $region6: #{tpu_custom_call.1} parent=1 // loop_footer
      %s32 = sadd.s32 1, %s28
    $region7: #{tpu_custom_call.1} parent=1 // loop_footer_branch
      %27 = sbr.rel target = $region3
    $region8: #{tpu_custom_call.1} parent=1 // loop_exit
      _
    %1307 = vsyncpa [#allocation4], 1
    %s1308 = scalar_lea.sflag [#allocation4], 1
    %1309 = vsyncpa %s1308, 1
    %1310 = vsyncpa [#allocation7], 1
    %s1311 = scalar_lea.sflag [#allocation7], 1
    %1312 = vsyncpa %s1311, 1
    %1313 = vsyncpa [#allocation10], 1
    %1314 = vsyncpa [#allocation5], 1
    %s1315 = scalar_lea.sflag [#allocation5], 1
    %1316 = vsyncpa %s1315, 1

</llo_original>
